<compile_context>
chip_gen: v7x
topology: tpu7x:2x2x1
jax: 0.10.0
libtpu: 0.0.40
codegen_flags: <defaults>
</compile_context>

<pallas_src>
from functools import partial

import jax
import jax.numpy as jnp
import numpy as np
from jax.experimental import pallas as pl
from jax.experimental.pallas import tpu as pltpu

PATCH = 8
S = PATCH * PATCH  # 64 spatial positions per patch


def _pick_pb(P, cap=16):
    """Largest even divisor of P (<= cap) that still leaves >= 2 grid steps.

    >= 2 steps keeps both v7x TensorCores busy and lets BlockSpec pipelining hide the
    x / residual / output DMAs; even pb keeps every lane dimension a multiple of 128.
    Falls back to pb == P (single step) only for tiny P with no such divisor.
    """
    for pb in range(min(P // 2, cap), 0, -1):
        if P % pb == 0 and pb % 2 == 0:
            return pb
    return P


def _pick_dk(D, cap=1024):
    """Contraction tile for the (D, D) value_conv_ weight: the largest multiple of 128
    dividing D (<= cap) that still gives >= 2 k-steps, so the weight streams through
    VMEM (pipelined DMA) instead of sitting fully resident."""
    limit = min(cap, D // 2)
    limit -= limit % 128
    for dk in range(limit, 0, -128):
        if D % dk == 0:
            return dk
    return D


# --------------------------- fused TH2 kernel ---------------------------
def _fused_kernel(xt_ref, xf_ref, xr_ref, wqkv_ref, bqkv_ref, wv2_ref, bv2_ref,
                  o_ref, r2_acc, *, pb, C, Sp, D):
    ki = pl.program_id(1)
    nk = pl.num_programs(1)

    # ---- inter-patch branch: softmax over a length-1 axis is identically 1, so the
    #      branch is exactly value_conv_.  Stream a (dk, D) bf16 weight slice per step
    #      and accumulate in f32. ----
    @pl.when(ki == 0)
    def _():
        r2_acc[...] = jnp.zeros_like(r2_acc)

    r2_acc[...] += jnp.dot(xf_ref[0].astype(wv2_ref.dtype), wv2_ref[...],
                           preferred_element_type=jnp.float32)              # (pb, D)

    # ---- intra-patch attention + combine, once per patch block (last k-step) ----
    @pl.when(ki == nk - 1)
    def _():
        # one fused QKV matmul across the whole patch block: (3C, C) x (C, pb*S)
        qkv = jnp.dot(wqkv_ref[...], xt_ref[...],
                      preferred_element_type=jnp.float32) + bqkv_ref[...]   # (3C, pb*S)
        qkv3 = qkv.reshape(3 * C, pb, Sp)                                   # (3C, pb, S)

        # per-patch Gram matrices: energy[p, s, t] = sum_c q[c,p,s] * k[c,p,t]
        if C < 32:
            # VPU path (small C): C broadcast outer products; an MXU contraction of
            # depth C would waste >95% of the systolic array.
            energy = qkv3[0][:, :, None] * qkv3[C][:, None, :]
            for c in range(1, C):
                energy = energy + qkv3[c][:, :, None] * qkv3[C + c][:, None, :]
        else:
            # MXU path (deep channel counts): batched dot over the patch block.
            qb = jnp.transpose(qkv3[:C], (1, 0, 2))                         # (pb, C, S)
            kb = jnp.transpose(qkv3[C:2 * C], (1, 0, 2))
            energy = jax.lax.dot_general(qb, kb, (((1,), (1,)), ((0,), (0,))),
                                         preferred_element_type=jnp.float32)

        # softmax over the last dim, computed once on the whole (pb, S, S) slab
        energy = energy - jnp.max(energy, axis=-1, keepdims=True)
        p_un = jnp.exp(energy)
        attn = p_un * pl.reciprocal(jnp.sum(p_un, axis=-1, keepdims=True),
                                    approx=True)                            # (pb, S, S)

        # out1[p, c, s] = sum_t v[p, c, t] * attn[p, s, t]   (torch bmm(V, attn^T))
        vb = jnp.transpose(qkv3[2 * C:], (1, 0, 2))                         # (pb, C, S)
        out1 = jax.lax.dot_general(vb, attn, (((2,), (2,)), ((0,), (0,))),
                                   preferred_element_type=jnp.float32)      # (pb, C, S)
        out1_flat = out1.reshape(pb, D)        # single reshape -> channel-major (pb, D)

        # combine both branches + sigmoid-gated residual; lane-dense (pb, D) store
        res = out1_flat + r2_acc[...] + bv2_ref[...]
        xr = xr_ref[0]                                                      # (pb, D)
        o_ref[0] = (xr + xr * jax.nn.sigmoid(res)).astype(o_ref.dtype)


def th2_fused(xt, xf, xr, wqkv, bqkv, wv2_t, bv2):
    C = xt.shape[0]
    P, D = xf.shape
    pb = _pick_pb(P)
    G = P // pb
    dk = _pick_dk(D)
    KT = D // dk

    # 3-D (G, pb, D) presentation: each per-block tile covers the full (pb, D) trailing
    # dims (satisfies the (8,128) BlockSpec rule even when pb < 8) and stays lane-dense.
    xf3 = xf.reshape(G, pb, D)
    xr3 = xr.reshape(G, pb, D)

    kern = partial(_fused_kernel, pb=pb, C=C, Sp=S, D=D)

    out3 = pl.pallas_call(
        kern,
        out_shape=jax.ShapeDtypeStruct((G, pb, D), xr.dtype),
        grid=(G, KT),
        in_specs=[
            # x, channel-major transposed: one (C, pb*S) slab per patch block
            pl.BlockSpec((C, pb * S), lambda i, k: (0, i)),
            # x, patch-flat (inter branch input): streamed along the contraction dim
            pl.BlockSpec((1, pb, dk), lambda i, k: (i, 0, k)),
            # residual (fold space), lane-dense
            pl.BlockSpec((1, pb, D), lambda i, k: (i, 0, 0)),
            # small constant weights: single-buffered (their blocks never change)
            pl.BlockSpec((3 * C, C), lambda i, k: (0, 0), pipeline_mode=pl.Buffered(1)),
            pl.BlockSpec((3 * C, 1), lambda i, k: (0, 0), pipeline_mode=pl.Buffered(1)),
            # value_conv_ weight: (dk, D) bf16 slices, double-buffered stream over k
            pl.BlockSpec((dk, D), lambda i, k: (k, 0)),
            pl.BlockSpec((1, D), lambda i, k: (0, 0), pipeline_mode=pl.Buffered(1)),
        ],
        out_specs=pl.BlockSpec((1, pb, D), lambda i, k: (i, 0, 0)),
        scratch_shapes=[pltpu.VMEM((pb, D), jnp.float32)],
        compiler_params=pltpu.CompilerParams(
            dimension_semantics=("parallel", "arbitrary"),
            vmem_limit_bytes=32 * 1024 * 1024),
    )(xt, xf3, xr3, wqkv, bqkv, wv2_t, bv2)
    return out3.reshape(P, D)


# --------------------------------- wrapper ---------------------------------
def th_forward(x, p):
    B, C, W, H = x.shape
    ps = PATCH
    npx, npy = W // ps, H // ps
    P = B * npx * npy
    D = C * S

    # torch: x.unfold(2,ps,ps).unfold(3,ps,ps) -> (B,C,npx,npy,ps,ps)
    u = x.reshape(B, C, npx, ps, npy, ps).transpose(0, 1, 2, 4, 3, 5)
    # torch: .contiguous().view(B,C,npx,ps,npy,ps)  (raw row-major reinterpretation)
    u = u.reshape(B, C, npx, ps, npy, ps)
    # torch: .permute(0,2,4,1,3,5).contiguous().view(-1,C,ps,ps)
    u = u.transpose(0, 2, 4, 1, 3, 5).reshape(P, C, ps, ps)
    x_patch = u.reshape(P, C, S)                    # (P, C, 64) patch view

    # kernel presentations of x (pure layout glue, done once in the wrapper):
    xt = x_patch.transpose(1, 0, 2).reshape(C, P * S)   # for the batched QKV matmul
    x_flat = x_patch.reshape(P, D)                       # inter-branch input, lane-dense

    # residual mapped into the output-fold patch layout, flattened channel-major so the
    # in-kernel gating + lane-dense store need no relayout
    xr_flat = (x.reshape(B, C, npx, ps, npy, ps)
                 .transpose(0, 2, 4, 1, 3, 5)
                 .reshape(P, D))

    # fused QKV weight / bias (bias added in-kernel with a broadcast VPU add)
    wqkv = jnp.concatenate([p["w_q"], p["w_k"], p["w_v"]], axis=0)            # (3C, C)
    bqkv = jnp.concatenate([p["b_q"], p["b_k"], p["b_v"]]).reshape(3 * C, 1)  # (3C, 1)

    # inter-patch branch weight (value_conv_), bf16 to halve HBM/VMEM traffic
    wv2_t = p["w_v2"].T.astype(jnp.bfloat16)                                  # (D, D)
    bv2 = p["b_v2"].reshape(1, D)

    out_flat = th2_fused(xt, x_flat, xr_flat, wqkv, bqkv, wv2_t, bv2)         # (P, D)

    # torch fold: view(B,npx,npy,C,ps,ps) -> permute(0,3,1,4,2,5) -> view(B,C,W,H)
    out = (out_flat.reshape(B, npx, npy, C, ps, ps)
                   .transpose(0, 3, 1, 4, 2, 5)
                   .reshape(B, C, W, H))
    return out


# ------------------------------ params / reference ------------------------------
def init_params(key, C):
    D = C * S
    ks = jax.random.split(key, 8)

    def conv1x1(kw, kb, cin, cout):
        bound = 1.0 / np.sqrt(cin)
        w = jax.random.uniform(kw, (cout, cin), jnp.float32, -bound, bound)
        b = jax.random.uniform(kb, (cout,), jnp.float32, -bound, bound)
        return w, b

    w_q, b_q = conv1x1(ks[0], ks[1], C, C)
    w_k, b_k = conv1x1(ks[2], ks[3], C, C)
    w_v, b_v = conv1x1(ks[4], ks[5], C, C)
    w_v2, b_v2 = conv1x1(ks[6], ks[7], D, D)
    return dict(w_q=w_q, b_q=b_q, w_k=w_k, b_k=b_k, w_v=w_v, b_v=b_v,
                w_v2=w_v2, b_v2=b_v2)


def th_reference(x, p):
    """Pure-JAX (f32) mirror of the torch forward, for verification."""
    B, C, W, H = x.shape
    ps = PATCH
    npx, npy = W // ps, H // ps
    P = B * npx * npy
    u = x.reshape(B, C, npx, ps, npy, ps).transpose(0, 1, 2, 4, 3, 5)
    u = u.reshape(B, C, npx, ps, npy, ps).transpose(0, 2, 4, 1, 3, 5).reshape(P, C, ps, ps)
    xp = u.reshape(P, C, S)
    xf = u.reshape(P, C * S)

    q = jnp.einsum("oc,pcs->pos", p["w_q"], xp) + p["b_q"][None, :, None]
    k = jnp.einsum("oc,pcs->pos", p["w_k"], xp) + p["b_k"][None, :, None]
    v = jnp.einsum("oc,pcs->pos", p["w_v"], xp) + p["b_v"][None, :, None]
    energy = jnp.einsum("pcs,pct->pst", q, k)
    attn = jax.nn.softmax(energy, axis=-1)
    out1 = jnp.einsum("pct,pst->pcs", v, attn)

    out2 = (xf @ p["w_v2"].T + p["b_v2"]).reshape(P, C, S)

    res_p = out1 + out2
    res = (res_p.reshape(B, npx, npy, C, ps, ps)
                .transpose(0, 3, 1, 4, 2, 5)
                .reshape(B, C, W, H))
    sig = jax.nn.sigmoid(res)
    return x + x * sig


if __name__ == "__main__":
    key = jax.random.PRNGKey(0)
    kx, kp = jax.random.split(key)

    B, C, W, H = 2, 4, 16, 16          # NCHW, spatial divisible by patch_size=8 -> P=8
    x = jax.random.normal(kx, (B, C, W, H), dtype=jnp.float32)
    params = init_params(kp, C)

    out = jax.jit(th_forward)(x, params)
    out = jax.block_until_ready(out)

    ref = th_reference(x, params)
    # tolerance covers the bf16 value_conv_ weight and the approximate reciprocal
    np.testing.assert_allclose(np.asarray(out), np.asarray(ref), atol=2e-2, rtol=2e-2)

    print("KERNEL_OK")
</pallas_src>

<mosaic_0001>
module attributes {stable_mosaic.version = 11 : i64} {
  func.func @_fused_kernel(%arg0: i32, %arg1: i32, %arg2: memref<4x256xf32, #tpu.memory_space<vmem>>, %arg3: memref<1x4x128xf32, #tpu.memory_space<vmem>>, %arg4: memref<1x4x256xf32, #tpu.memory_space<vmem>>, %arg5: memref<12x4xf32, #tpu.memory_space<vmem>>, %arg6: memref<12x1xf32, #tpu.memory_space<vmem>>, %arg7: memref<128x256xbf16, #tpu.memory_space<vmem>>, %arg8: memref<1x256xf32, #tpu.memory_space<vmem>>, %arg9: memref<1x4x256xf32, #tpu.memory_space<vmem>>, %arg10: memref<4x256xf32, #tpu.memory_space<vmem>>) attributes {dimension_semantics = [#tpu.dimension_semantics<parallel>, #tpu.dimension_semantics<arbitrary>], iteration_bounds = array<i64: 2, 2>, scalar_prefetch = 0 : i64, scratch_operands = 1 : i64, tpu.core_type = #tpu.core_type<tc>, window_params = [{transform_indices = @transform_0, window_bounds = array<i64: 4, 256>}, {transform_indices = @transform_1, window_bounds = array<i64: 1, 4, 128>}, {transform_indices = @transform_2, window_bounds = array<i64: 1, 4, 256>}, {pipeline_mode = #tpu.pipeline_mode<synchronous>, transform_indices = @transform_3, window_bounds = array<i64: 12, 4>}, {pipeline_mode = #tpu.pipeline_mode<synchronous>, transform_indices = @transform_4, window_bounds = array<i64: 12, 1>}, {transform_indices = @transform_5, window_bounds = array<i64: 128, 256>}, {pipeline_mode = #tpu.pipeline_mode<synchronous>, transform_indices = @transform_6, window_bounds = array<i64: 1, 256>}, {transform_indices = @transform_7, window_bounds = array<i64: 1, 4, 256>}]} {
    %c0_i32 = arith.constant 0 : i32
    %0 = arith.cmpi eq, %arg1, %c0_i32 : i32
    %1 = arith.extui %0 : i1 to i32
    %c0_i32_0 = arith.constant 0 : i32
    %2 = arith.cmpi ne, %1, %c0_i32_0 : i32
    scf.if %2 {
      %cst_10 = arith.constant 0.000000e+00 : f32
      %14 = vector.broadcast %cst_10 : f32 to vector<4x256xf32>
      %c0_11 = arith.constant 0 : index
      %c0_12 = arith.constant 0 : index
      %15 = vector.load %arg10[%c0_11, %c0_12] : memref<4x256xf32, #tpu.memory_space<vmem>>, vector<4x256xf32>
      tpu.vector_store %arg10[%c0_11, %c0_12], %14 {strides = array<i32>} : memref<4x256xf32, #tpu.memory_space<vmem>>, vector<4x256xf32>,
    } else {
    }
    %c0 = arith.constant 0 : index
    %c0_1 = arith.constant 0 : index
    %3 = vector.load %arg10[%c0, %c0_1] : memref<4x256xf32, #tpu.memory_space<vmem>>, vector<4x256xf32>
    %c0_2 = arith.constant 0 : index
    %c0_3 = arith.constant 0 : index
    %c0_4 = arith.constant 0 : index
    %4 = vector.load %arg3[%c0_2, %c0_3, %c0_4] : memref<1x4x128xf32, #tpu.memory_space<vmem>>, vector<1x4x128xf32>
    %5 = vector.shape_cast %4 : vector<1x4x128xf32> to vector<4x128xf32>
    %6 = arith.truncf %5 : vector<4x128xf32> to vector<4x128xbf16>
    %c0_5 = arith.constant 0 : index
    %c0_6 = arith.constant 0 : index
    %7 = vector.load %arg7[%c0_5, %c0_6] : memref<128x256xbf16, #tpu.memory_space<vmem>>, vector<128x256xbf16>
    %cst = arith.constant dense<0.000000e+00> : vector<4x256xf32>
    %8 = tpu.matmul %6, %7, %cst {dimension_numbers = #tpu.dot_dimension_numbers<[1], [0], [0], [1], [0, 0, 1, 1], [], []>} : vector<4x128xbf16>, vector<128x256xbf16>, vector<4x256xf32> -> vector<4x256xf32>
    %9 = arith.addf %3, %8 : vector<4x256xf32>
    %c0_7 = arith.constant 0 : index
    %c0_8 = arith.constant 0 : index
    %10 = vector.load %arg10[%c0_7, %c0_8] : memref<4x256xf32, #tpu.memory_space<vmem>>, vector<4x256xf32>
    tpu.vector_store %arg10[%c0_7, %c0_8], %9 {strides = array<i32>} : memref<4x256xf32, #tpu.memory_space<vmem>>, vector<4x256xf32>,
    %c1_i32 = arith.constant 1 : i32
    %11 = arith.cmpi eq, %arg1, %c1_i32 : i32
    %12 = arith.extui %11 : i1 to i32
    %c0_i32_9 = arith.constant 0 : i32
    %13 = arith.cmpi ne, %12, %c0_i32_9 : i32
    scf.if %13 {
      %c0_10 = arith.constant 0 : index
      %c0_11 = arith.constant 0 : index
      %14 = vector.load %arg5[%c0_10, %c0_11] : memref<12x4xf32, #tpu.memory_space<vmem>>, vector<12x4xf32>
      %c0_12 = arith.constant 0 : index
      %c0_13 = arith.constant 0 : index
      %15 = vector.load %arg2[%c0_12, %c0_13] : memref<4x256xf32, #tpu.memory_space<vmem>>, vector<4x256xf32>
      %cst_14 = arith.constant dense<0.000000e+00> : vector<12x256xf32>
      %16 = tpu.matmul %14, %15, %cst_14 {dimension_numbers = #tpu.dot_dimension_numbers<[1], [0], [0], [1], [0, 0, 1, 1], [], []>} : vector<12x4xf32>, vector<4x256xf32>, vector<12x256xf32> -> vector<12x256xf32>
      %c0_15 = arith.constant 0 : index
      %c0_16 = arith.constant 0 : index
      %17 = vector.load %arg6[%c0_15, %c0_16] : memref<12x1xf32, #tpu.memory_space<vmem>>, vector<12x1xf32>
      %18 = vector.broadcast %17 : vector<12x1xf32> to vector<12x256xf32>
      %19 = arith.addf %16, %18 : vector<12x256xf32>
      %20 = vector.shape_cast %19 : vector<12x256xf32> to vector<12x4x64xf32>
      %21 = vector.extract_strided_slice %20 {offsets = [0, 0, 0], sizes = [1, 4, 64], strides = [1, 1, 1]} : vector<12x4x64xf32> to vector<1x4x64xf32>
      %22 = vector.shape_cast %21 : vector<1x4x64xf32> to vector<4x64xf32>
      %23 = vector.shape_cast %22 : vector<4x64xf32> to vector<4x64x1xf32>
      %24 = vector.extract_strided_slice %20 {offsets = [4, 0, 0], sizes = [1, 4, 64], strides = [1, 1, 1]} : vector<12x4x64xf32> to vector<1x4x64xf32>
      %25 = vector.shape_cast %24 : vector<1x4x64xf32> to vector<4x64xf32>
      %26 = vector.shape_cast %25 : vector<4x64xf32> to vector<4x1x64xf32>
      %27 = vector.broadcast %23 : vector<4x64x1xf32> to vector<4x64x64xf32>
      %28 = vector.broadcast %26 : vector<4x1x64xf32> to vector<4x64x64xf32>
      %29 = arith.mulf %27, %28 : vector<4x64x64xf32>
      %30 = vector.extract_strided_slice %20 {offsets = [1, 0, 0], sizes = [1, 4, 64], strides = [1, 1, 1]} : vector<12x4x64xf32> to vector<1x4x64xf32>
      %31 = vector.shape_cast %30 : vector<1x4x64xf32> to vector<4x64xf32>
      %32 = vector.shape_cast %31 : vector<4x64xf32> to vector<4x64x1xf32>
      %33 = vector.extract_strided_slice %20 {offsets = [5, 0, 0], sizes = [1, 4, 64], strides = [1, 1, 1]} : vector<12x4x64xf32> to vector<1x4x64xf32>
      %34 = vector.shape_cast %33 : vector<1x4x64xf32> to vector<4x64xf32>
      %35 = vector.shape_cast %34 : vector<4x64xf32> to vector<4x1x64xf32>
      %36 = vector.broadcast %32 : vector<4x64x1xf32> to vector<4x64x64xf32>
      %37 = vector.broadcast %35 : vector<4x1x64xf32> to vector<4x64x64xf32>
      %38 = arith.mulf %36, %37 : vector<4x64x64xf32>
      %39 = arith.addf %29, %38 : vector<4x64x64xf32>
      %40 = vector.extract_strided_slice %20 {offsets = [2, 0, 0], sizes = [1, 4, 64], strides = [1, 1, 1]} : vector<12x4x64xf32> to vector<1x4x64xf32>
      %41 = vector.shape_cast %40 : vector<1x4x64xf32> to vector<4x64xf32>
      %42 = vector.shape_cast %41 : vector<4x64xf32> to vector<4x64x1xf32>
      %43 = vector.extract_strided_slice %20 {offsets = [6, 0, 0], sizes = [1, 4, 64], strides = [1, 1, 1]} : vector<12x4x64xf32> to vector<1x4x64xf32>
      %44 = vector.shape_cast %43 : vector<1x4x64xf32> to vector<4x64xf32>
      %45 = vector.shape_cast %44 : vector<4x64xf32> to vector<4x1x64xf32>
      %46 = vector.broadcast %42 : vector<4x64x1xf32> to vector<4x64x64xf32>
      %47 = vector.broadcast %45 : vector<4x1x64xf32> to vector<4x64x64xf32>
      %48 = arith.mulf %46, %47 : vector<4x64x64xf32>
      %49 = arith.addf %39, %48 : vector<4x64x64xf32>
      %50 = vector.extract_strided_slice %20 {offsets = [3, 0, 0], sizes = [1, 4, 64], strides = [1, 1, 1]} : vector<12x4x64xf32> to vector<1x4x64xf32>
      %51 = vector.shape_cast %50 : vector<1x4x64xf32> to vector<4x64xf32>
      %52 = vector.shape_cast %51 : vector<4x64xf32> to vector<4x64x1xf32>
      %53 = vector.extract_strided_slice %20 {offsets = [7, 0, 0], sizes = [1, 4, 64], strides = [1, 1, 1]} : vector<12x4x64xf32> to vector<1x4x64xf32>
      %54 = vector.shape_cast %53 : vector<1x4x64xf32> to vector<4x64xf32>
      %55 = vector.shape_cast %54 : vector<4x64xf32> to vector<4x1x64xf32>
      %56 = vector.broadcast %52 : vector<4x64x1xf32> to vector<4x64x64xf32>
      %57 = vector.broadcast %55 : vector<4x1x64xf32> to vector<4x64x64xf32>
      %58 = arith.mulf %56, %57 : vector<4x64x64xf32>
      %59 = arith.addf %49, %58 : vector<4x64x64xf32>
      %cst_17 = arith.constant dense<0xFF800000> : vector<4x64xf32>
      %60 = vector.multi_reduction <maximumf>, %59, %cst_17 [2] : vector<4x64x64xf32> to vector<4x64xf32>
      %61 = vector.shape_cast %60 : vector<4x64xf32> to vector<4x64x1xf32>
      %62 = vector.broadcast %61 : vector<4x64x1xf32> to vector<4x64x64xf32>
      %63 = arith.subf %59, %62 : vector<4x64x64xf32>
      %64 = math.exp %63 : vector<4x64x64xf32>
      %cst_18 = arith.constant dense<0.000000e+00> : vector<4x64xf32>
      %65 = vector.multi_reduction <add>, %64, %cst_18 [2] : vector<4x64x64xf32> to vector<4x64xf32>
      %66 = vector.shape_cast %65 : vector<4x64xf32> to vector<4x64x1xf32>
      %67 = tpu.reciprocal %66 {approx = true} : vector<4x64x1xf32> -> vector<4x64x1xf32>
      %68 = vector.broadcast %67 : vector<4x64x1xf32> to vector<4x64x64xf32>
      %69 = arith.mulf %64, %68 : vector<4x64x64xf32>
      %70 = vector.extract_strided_slice %20 {offsets = [8, 0, 0], sizes = [4, 4, 64], strides = [1, 1, 1]} : vector<12x4x64xf32> to vector<4x4x64xf32>
      %71 = tpu.transpose %70, [1, 0, 2] : vector<4x4x64xf32> -> vector<4x4x64xf32>
      %cst_19 = arith.constant dense<0.000000e+00> : vector<4x4x64xf32>
      %72 = tpu.matmul %71, %69, %cst_19 {dimension_numbers = #tpu.dot_dimension_numbers<[2], [2], [1], [1], [0, 0, 0, 1, 1, 1], [0], [0]>} : vector<4x4x64xf32>, vector<4x64x64xf32>, vector<4x4x64xf32> -> vector<4x4x64xf32>
      %73 = vector.shape_cast %72 : vector<4x4x64xf32> to vector<4x256xf32>
      %c0_20 = arith.constant 0 : index
      %c0_21 = arith.constant 0 : index
      %74 = vector.load %arg10[%c0_20, %c0_21] : memref<4x256xf32, #tpu.memory_space<vmem>>, vector<4x256xf32>
      %75 = arith.addf %73, %74 : vector<4x256xf32>
      %c0_22 = arith.constant 0 : index
      %c0_23 = arith.constant 0 : index
      %76 = vector.load %arg8[%c0_22, %c0_23] : memref<1x256xf32, #tpu.memory_space<vmem>>, vector<1x256xf32>
      %77 = vector.broadcast %76 : vector<1x256xf32> to vector<4x256xf32>
      %78 = arith.addf %75, %77 : vector<4x256xf32>
      %c0_24 = arith.constant 0 : index
      %c0_25 = arith.constant 0 : index
      %c0_26 = arith.constant 0 : index
      %79 = vector.load %arg4[%c0_24, %c0_25, %c0_26] : memref<1x4x256xf32, #tpu.memory_space<vmem>>, vector<1x4x256xf32>
      %80 = vector.shape_cast %79 : vector<1x4x256xf32> to vector<4x256xf32>
      %81 = arith.negf %78 : vector<4x256xf32>
      %82 = math.exp %81 : vector<4x256xf32>
      %cst_27 = arith.constant 1.000000e+00 : f32
      %83 = vector.broadcast %cst_27 : f32 to vector<4x256xf32>
      %84 = arith.addf %83, %82 : vector<4x256xf32>
      %85 = arith.divf %83, %84 : vector<4x256xf32>
      %86 = arith.mulf %80, %85 : vector<4x256xf32>
      %87 = arith.addf %80, %86 : vector<4x256xf32>
      %c0_28 = arith.constant 0 : index
      %c0_29 = arith.constant 0 : index
      %c0_30 = arith.constant 0 : index
      %88 = vector.load %arg9[%c0_28, %c0_29, %c0_30] : memref<1x4x256xf32, #tpu.memory_space<vmem>>, vector<1x4x256xf32>
      %89 = vector.shape_cast %88 : vector<1x4x256xf32> to vector<4x256xf32>
      %90 = vector.shape_cast %87 : vector<4x256xf32> to vector<1x4x256xf32>
      tpu.vector_store %arg9[%c0_28, %c0_29, %c0_30], %90 {strides = array<i32>} : memref<1x4x256xf32, #tpu.memory_space<vmem>>, vector<1x4x256xf32>,
    } else {
    }
    return
  }
  func.func @transform_0(%arg0: i32, %arg1: i32) -> (i32, i32) {
    %c0_i32 = arith.constant 0 : i32
    %c0_i32_0 = arith.constant 0 : i32
    return %c0_i32, %arg0 : i32, i32
  }
  func.func @transform_1(%arg0: i32, %arg1: i32) -> (i32, i32, i32) {
    %c0_i32 = arith.constant 0 : i32
    %c0_i32_0 = arith.constant 0 : i32
    return %arg0, %c0_i32, %arg1 : i32, i32, i32
  }
  func.func @transform_2(%arg0: i32, %arg1: i32) -> (i32, i32, i32) {
    %c0_i32 = arith.constant 0 : i32
    %c0_i32_0 = arith.constant 0 : i32
    %c0_i32_1 = arith.constant 0 : i32
    return %arg0, %c0_i32, %c0_i32_0 : i32, i32, i32
  }
  func.func @transform_3(%arg0: i32, %arg1: i32) -> (i32, i32) {
    %c0_i32 = arith.constant 0 : i32
    %c0_i32_0 = arith.constant 0 : i32
    %c0_i32_1 = arith.constant 0 : i32
    return %c0_i32, %c0_i32_0 : i32, i32
  }
  func.func @transform_4(%arg0: i32, %arg1: i32) -> (i32, i32) {
    %c0_i32 = arith.constant 0 : i32
    %c0_i32_0 = arith.constant 0 : i32
    %c0_i32_1 = arith.constant 0 : i32
    return %c0_i32, %c0_i32_0 : i32, i32
  }
  func.func @transform_5(%arg0: i32, %arg1: i32) -> (i32, i32) {
    %c0_i32 = arith.constant 0 : i32
    %c0_i32_0 = arith.constant 0 : i32
    return %arg1, %c0_i32 : i32, i32
  }
  func.func @transform_6(%arg0: i32, %arg1: i32) -> (i32, i32) {
    %c0_i32 = arith.constant 0 : i32
    %c0_i32_0 = arith.constant 0 : i32
    %c0_i32_1 = arith.constant 0 : i32
    return %c0_i32, %c0_i32_0 : i32, i32
  }
  func.func @transform_7(%arg0: i32, %arg1: i32) -> (i32, i32, i32) {
    %c0_i32 = arith.constant 0 : i32
    %c0_i32_0 = arith.constant 0 : i32
    %c0_i32_1 = arith.constant 0 : i32
    return %arg0, %c0_i32, %c0_i32_0 : i32, i32, i32
  }
}

</mosaic_0001>

<llo_original>
// kernel: th_forward.1
$region0: #{th_forward.1}
  #allocation0 [shape = 'u32[]', space=smem, size = 0x4, offset = 0x4, fixed_abs, tag = 'smem constant byte address 0x4 - core index']
  #allocation1 [shape = 'u32[144,128]{1,0:T(1,128)}', space=vmem, size = 0x12000, scoped, tag = 'internal scratch']
  #allocation2 [shape = 'f32[4,256]{1,0:T(4,128)}', space=vmem, size = 0x1000, scoped, tag = 'scratch operand']
  %s0 = inlined_call_operand.vmem [shape: f32[4,512], index: 0, kind: input, shape index: {}]
  %s1 = inlined_call_operand.vmem [shape: f32[2,4,256], index: 1, kind: input, shape index: {}]
  %s2 = inlined_call_operand.vmem [shape: f32[2,4,256], index: 2, kind: input, shape index: {}]
  %s3 = inlined_call_operand.vmem [shape: f32[12,4], index: 3, kind: input, shape index: {}]
  %s4 = inlined_call_operand.vmem [shape: f32[12,1], index: 4, kind: input, shape index: {}]
  %s5 = inlined_call_operand.vmem [shape: bf16[256,256], index: 5, kind: input, shape index: {}]
  %s6 = inlined_call_operand.vmem [shape: f32[1,256], index: 6, kind: input, shape index: {}]
  %s7 = inlined_call_operand.vmem [shape: f32[2,4,256], index: 7, kind: output, shape index: {}]
  %s8 = sld [smem:[#allocation0]]
  $region69: #{th_forward.1} parent=0
    _
  %s10 = ssub.s32 1, %s8
  %s11 = scalar_select 0, %s10, %s8
  loop: start=0, step=1, limit=6
  $region2: #{th_forward.1} parent=0 // loop_pre_header
    _
  $region3: #{th_forward.1} parent=0 // loop_header
    %s13 = sphi 0, %s17
    %p14 = scmp.ge.s32.totalorder %s13, 6
    %s20 = sphi 0, %s32
    %s21 = sphi 0, %s28
    %s22 = sphi 0, %s20
    %s23 = sphi 0, %s21
    %s24 = sphi 0, %s22
    %s25 = sphi 0, %s23
    %s35 = sphi 0, %s37
    %s38 = sphi 0, %s35
    %s39 = sphi 0, %s38
    %s55 = sphi 0, %s39
    %s63 = sphi 0, %s65
    %s66 = sphi 0, %s63
    %s67 = sphi 0, %s66
    %s83 = sphi 0, %s67
    %s89 = sphi 0, %s91
    %s92 = sphi 0, %s89
    %s93 = sphi 0, %s92
    %s109 = sphi 0, %s93
    %s113 = sphi 0, %s113
    %s115 = sphi 0, %s113
    %s116 = sphi 0, %s115
    %s130 = sphi 0, %s116
    %s134 = sphi 0, %s134
    %s136 = sphi 0, %s134
    %s137 = sphi 0, %s136
    %s151 = sphi 0, %s137
    %s157 = sphi 0, %s159
    %s160 = sphi 0, %s157
    %s161 = sphi 0, %s160
    %s177 = sphi 0, %s161
    %s181 = sphi 0, %s181
    %s183 = sphi 0, %s181
    %s184 = sphi 0, %s183
    %s198 = sphi 0, %s184
    %s204 = sphi 0, %s206
    %s207 = sphi 0, %s204
    %s208 = sphi 0, %s207
    %s224 = sphi 0, %s208
  $region4: #{th_forward.1} parent=0 // loop_header_branch
    %16 = sbr.rel (%p14) target = $region8
  $region5: #{th_forward.1} parent=0 // loop_body
    %s18 = ssub.s32 %s13, 1
    %s19 = ssub.s32 %s13, 2
    %s26 = sadd.s32 1, %s21
    %p27 = scmp.ge.s32.totalorder %s26, 2
    %s28 = scalar_select %p27, 0, %s26
    %s29 = sadd.s32 1, %s20
    %s30 = scalar_select %p27, %s29, %s20
    %p31 = scmp.ge.s32.totalorder %s30, 2
    %s32 = scalar_select %p31, 0, %s30
    %s33 = ssub.s32 %s20, %s32
    %p34 = scmp.eq.s32.totalorder %s33, 0
    %s36 = sadd.s32 %s35, 1
    %s37 = scalar_select %p34, %s35, %s36
    %p40 = pneg %p34
    %p41 = scmp.eq.s32.totalorder %s13, 3
    %p42 = por %p40, %p41
    %p43 = scmp.ne.s32.totalorder %s35, %s38
    %p44 = scmp.eq.s32.totalorder %s13, 0
    %p45 = por %p43, %p44
    %p46 = scmp.ne.s32.totalorder %s35, %s38
    %p47 = scmp.eq.s32.totalorder %s18, 3
    %p48 = por %p46, %p47
    %p49 = scmp.ne.s32.totalorder %s38, %s39
    %p50 = scmp.eq.s32.totalorder %s18, 0
    %p51 = por %p49, %p50
    %p52 = scmp.ne.s32.totalorder %s38, %s39
    %p53 = scmp.eq.s32.totalorder %s19, 3
    %p54 = por %p52, %p53
    %p56 = scmp.ne.s32.totalorder %s39, %s55
    %p57 = scmp.eq.s32.totalorder %s19, 0
    %p58 = por %p56, %p57
    %s59 = ssub.s32 %s20, %s32
    %s60 = ssub.s32 %s21, %s28
    %s61 = sor.u32 %s59, %s60
    %p62 = scmp.eq.s32.totalorder %s61, 0
    %s64 = sadd.s32 %s63, 1
    %s65 = scalar_select %p62, %s63, %s64
    %p68 = pneg %p62
    %p69 = scmp.eq.s32.totalorder %s13, 3
    %p70 = por %p68, %p69
    %p71 = scmp.ne.s32.totalorder %s63, %s66
    %p72 = scmp.eq.s32.totalorder %s13, 0
    %p73 = por %p71, %p72
    %p74 = scmp.ne.s32.totalorder %s63, %s66
    %p75 = scmp.eq.s32.totalorder %s18, 3
    %p76 = por %p74, %p75
    %p77 = scmp.ne.s32.totalorder %s66, %s67
    %p78 = scmp.eq.s32.totalorder %s18, 0
    %p79 = por %p77, %p78
    %p80 = scmp.ne.s32.totalorder %s66, %s67
    %p81 = scmp.eq.s32.totalorder %s19, 3
    %p82 = por %p80, %p81
    %p84 = scmp.ne.s32.totalorder %s67, %s83
    %p85 = scmp.eq.s32.totalorder %s19, 0
    %p86 = por %p84, %p85
    %s87 = ssub.s32 %s20, %s32
    %p88 = scmp.eq.s32.totalorder %s87, 0
    %s90 = sadd.s32 %s89, 1
    %s91 = scalar_select %p88, %s89, %s90
    %p94 = pneg %p88
    %p95 = scmp.eq.s32.totalorder %s13, 3
    %p96 = por %p94, %p95
    %p97 = scmp.ne.s32.totalorder %s89, %s92
    %p98 = scmp.eq.s32.totalorder %s13, 0
    %p99 = por %p97, %p98
    %p100 = scmp.ne.s32.totalorder %s89, %s92
    %p101 = scmp.eq.s32.totalorder %s18, 3
    %p102 = por %p100, %p101
    %p103 = scmp.ne.s32.totalorder %s92, %s93
    %p104 = scmp.eq.s32.totalorder %s18, 0
    %p105 = por %p103, %p104
    %p106 = scmp.ne.s32.totalorder %s92, %s93
    %p107 = scmp.eq.s32.totalorder %s19, 3
    %p108 = por %p106, %p107
    %p110 = scmp.ne.s32.totalorder %s93, %s109
    %p111 = scmp.eq.s32.totalorder %s19, 0
    %p112 = por %p110, %p111
    %s114 = sadd.s32 %s113, 1
    %p117 = scmp.eq.s32.totalorder %s13, 3
    %p118 = scmp.ne.s32.totalorder %s113, %s115
    %p119 = scmp.eq.s32.totalorder %s13, 0
    %p120 = por %p118, %p119
    %p121 = scmp.ne.s32.totalorder %s113, %s115
    %p122 = scmp.eq.s32.totalorder %s18, 3
    %p123 = por %p121, %p122
    %p124 = scmp.ne.s32.totalorder %s115, %s116
    %p125 = scmp.eq.s32.totalorder %s18, 0
    %p126 = por %p124, %p125
    %p127 = scmp.ne.s32.totalorder %s115, %s116
    %p128 = scmp.eq.s32.totalorder %s19, 3
    %p129 = por %p127, %p128
    %p131 = scmp.ne.s32.totalorder %s116, %s130
    %p132 = scmp.eq.s32.totalorder %s19, 0
    %p133 = por %p131, %p132
    %s135 = sadd.s32 %s134, 1
    %p138 = scmp.eq.s32.totalorder %s13, 3
    %p139 = scmp.ne.s32.totalorder %s134, %s136
    %p140 = scmp.eq.s32.totalorder %s13, 0
    %p141 = por %p139, %p140
    %p142 = scmp.ne.s32.totalorder %s134, %s136
    %p143 = scmp.eq.s32.totalorder %s18, 3
    %p144 = por %p142, %p143
    %p145 = scmp.ne.s32.totalorder %s136, %s137
    %p146 = scmp.eq.s32.totalorder %s18, 0
    %p147 = por %p145, %p146
    %p148 = scmp.ne.s32.totalorder %s136, %s137
    %p149 = scmp.eq.s32.totalorder %s19, 3
    %p150 = por %p148, %p149
    %p152 = scmp.ne.s32.totalorder %s137, %s151
    %p153 = scmp.eq.s32.totalorder %s19, 0
    %p154 = por %p152, %p153
    %s155 = ssub.s32 %s21, %s28
    %p156 = scmp.eq.s32.totalorder %s155, 0
    %s158 = sadd.s32 %s157, 1
    %s159 = scalar_select %p156, %s157, %s158
    %p162 = pneg %p156
    %p163 = scmp.eq.s32.totalorder %s13, 3
    %p164 = por %p162, %p163
    %p165 = scmp.ne.s32.totalorder %s157, %s160
    %p166 = scmp.eq.s32.totalorder %s13, 0
    %p167 = por %p165, %p166
    %p168 = scmp.ne.s32.totalorder %s157, %s160
    %p169 = scmp.eq.s32.totalorder %s18, 3
    %p170 = por %p168, %p169
    %p171 = scmp.ne.s32.totalorder %s160, %s161
    %p172 = scmp.eq.s32.totalorder %s18, 0
    %p173 = por %p171, %p172
    %p174 = scmp.ne.s32.totalorder %s160, %s161
    %p175 = scmp.eq.s32.totalorder %s19, 3
    %p176 = por %p174, %p175
    %p178 = scmp.ne.s32.totalorder %s161, %s177
    %p179 = scmp.eq.s32.totalorder %s19, 0
    %p180 = por %p178, %p179
    %s182 = sadd.s32 %s181, 1
    %p185 = scmp.eq.s32.totalorder %s13, 3
    %p186 = scmp.ne.s32.totalorder %s181, %s183
    %p187 = scmp.eq.s32.totalorder %s13, 0
    %p188 = por %p186, %p187
    %p189 = scmp.ne.s32.totalorder %s181, %s183
    %p190 = scmp.eq.s32.totalorder %s18, 3
    %p191 = por %p189, %p190
    %p192 = scmp.ne.s32.totalorder %s183, %s184
    %p193 = scmp.eq.s32.totalorder %s18, 0
    %p194 = por %p192, %p193
    %p195 = scmp.ne.s32.totalorder %s183, %s184
    %p196 = scmp.eq.s32.totalorder %s19, 3
    %p197 = por %p195, %p196
    %p199 = scmp.ne.s32.totalorder %s184, %s198
    %p200 = scmp.eq.s32.totalorder %s19, 0
    %p201 = por %p199, %p200
    %s202 = ssub.s32 %s20, %s32
    %p203 = scmp.eq.s32.totalorder %s202, 0
    %s205 = sadd.s32 %s204, 1
    %s206 = scalar_select %p203, %s204, %s205
    %p209 = pneg %p203
    %p210 = scmp.eq.s32.totalorder %s13, 3
    %p211 = por %p209, %p210
    %p212 = scmp.ne.s32.totalorder %s204, %s207
    %p213 = scmp.eq.s32.totalorder %s13, 0
    %p214 = por %p212, %p213
    %p215 = scmp.ne.s32.totalorder %s204, %s207
    %p216 = scmp.eq.s32.totalorder %s18, 3
    %p217 = por %p215, %p216
    %p218 = scmp.ne.s32.totalorder %s207, %s208
    %p219 = scmp.eq.s32.totalorder %s18, 0
    %p220 = por %p218, %p219
    %p221 = scmp.ne.s32.totalorder %s207, %s208
    %p222 = scmp.eq.s32.totalorder %s19, 3
    %p223 = por %p221, %p222
    %p225 = scmp.ne.s32.totalorder %s208, %s224
    %p226 = scmp.eq.s32.totalorder %s19, 0
    %p227 = por %p225, %p226
    %p228 = scmp.le.s32.totalorder 1, %s13
    %p229 = scmp.lt.s32.totalorder %s13, 5
    %p230 = pnand %p228, %p229
    %p231 = pneg %p230
    // Predicated region
    $region9: #{th_forward.1} parent=5 // pred_check
      _
    $region10: #{th_forward.1} parent=5 // pred_check_branch
      %233 = sbr.rel (%p230) target = $region12
    $region11: #{th_forward.1} parent=5 // pred_region
      %s234 = ssub.s32 %s13, 1
      // Predicated region
      $region13: #{th_forward.1} parent=11 // pred_check
        %p235 = pneg %p126
      $region14: #{th_forward.1} parent=11 // pred_check_branch
        %237 = sbr.rel (%p235) target = $region16
      $region15: #{th_forward.1} parent=11 // pred_region
        _
      $region16: #{th_forward.1} parent=11 // pred_fallthru
        _
      // Predicated region
      $region17: #{th_forward.1} parent=11 // pred_check
        %p238 = pneg %p147
      $region18: #{th_forward.1} parent=11 // pred_check_branch
        %240 = sbr.rel (%p238) target = $region20
      $region19: #{th_forward.1} parent=11 // pred_region
        _
      $region20: #{th_forward.1} parent=11 // pred_fallthru
        _
      // Predicated region
      $region21: #{th_forward.1} parent=11 // pred_check
        %p241 = pneg %p194
      $region22: #{th_forward.1} parent=11 // pred_check_branch
        %243 = sbr.rel (%p241) target = $region24
      $region23: #{th_forward.1} parent=11 // pred_region
        _
      $region24: #{th_forward.1} parent=11 // pred_fallthru
        _
    $region12: #{th_forward.1} parent=5 // pred_fallthru
      _
    %p244 = scmp.lt.s32.totalorder %s13, 4
    // Predicated region
    $region25: #{th_forward.1} parent=5 // pred_check
      %p245 = pneg %p244
    $region26: #{th_forward.1} parent=5 // pred_check_branch
      %247 = sbr.rel (%p245) target = $region28
    $region27: #{th_forward.1} parent=5 // pred_region
      // Predicated region
      $region29: #{th_forward.1} parent=27 // pred_check
        %p248 = pneg %p45
      $region30: #{th_forward.1} parent=27 // pred_check_branch
        %250 = sbr.rel (%p248) target = $region32
      $region31: #{th_forward.1} parent=27 // pred_region
        %s251 = smul.u32 2, %s20
        %p252 = scmp.lt.s32.totalorder %s251, 3
        %s253 = scalar_select %p252, %s251, 3
        %s254 = smul.addr %s253, 4
        %s255 = scalar_lea.vmem %s0, %s254
        %s256 = smul.u32 2, %s20
      $region32: #{th_forward.1} parent=27 // pred_fallthru
        _
      // Predicated region
      $region33: #{th_forward.1} parent=27 // pred_check
        %p257 = pneg %p73
      $region34: #{th_forward.1} parent=27 // pred_check_branch
        %259 = sbr.rel (%p257) target = $region36
      $region35: #{th_forward.1} parent=27 // pred_region
        %p260 = scmp.lt.s32.totalorder %s20, 1
        %s261 = scalar_select %p260, %s20, 1
        %p262 = scmp.lt.s32.totalorder %s21, 1
        %s263 = scalar_select %p262, %s21, 1
        %s264 = smul.addr %s261, 2
        %s265 = sadd.s32 %s263, %s264
        %s266 = smul.addr %s265, 4
        %s267 = scalar_lea.vmem %s1, %s266
      $region36: #{th_forward.1} parent=27 // pred_fallthru
        _
      // Predicated region
      $region37: #{th_forward.1} parent=27 // pred_check
        %p268 = pneg %p99
      $region38: #{th_forward.1} parent=27 // pred_check_branch
        %270 = sbr.rel (%p268) target = $region40
      $region39: #{th_forward.1} parent=27 // pred_region
        %p271 = scmp.lt.s32.totalorder %s20, 1
        %s272 = scalar_select %p271, %s20, 1
        %s273 = smul.addr %s272, 2
        %s274 = smul.addr %s273, 4
        %s275 = scalar_lea.vmem %s2, %s274
      $region40: #{th_forward.1} parent=27 // pred_fallthru
        _
      // Predicated region
      $region41: #{th_forward.1} parent=27 // pred_check
        %p276 = pneg %p167
      $region42: #{th_forward.1} parent=27 // pred_check_branch
        %278 = sbr.rel (%p276) target = $region44
      $region43: #{th_forward.1} parent=27 // pred_region
        %s279 = smul.u32 16, %s21
        %p280 = scmp.lt.s32.totalorder %s279, 31
        %s281 = scalar_select %p280, %s279, 31
        %s282 = smul.addr %s281, 2
        %s283 = smul.addr %s282, 4
        %s284 = scalar_lea.vmem %s5, %s283
        %s285 = smul.u32 16, %s21
      $region44: #{th_forward.1} parent=27 // pred_fallthru
        _
    $region28: #{th_forward.1} parent=5 // pred_fallthru
      _
    %p286 = scmp.le.s32.totalorder 1, %s13
    %p287 = scmp.lt.s32.totalorder %s13, 5
    %p288 = pnand %p286, %p287
    %p289 = pneg %p288
    // Predicated region
    $region45: #{th_forward.1} parent=5 // pred_check
      _
    $region46: #{th_forward.1} parent=5 // pred_check_branch
      %291 = sbr.rel (%p288) target = $region48
    $region47: #{th_forward.1} parent=5 // pred_region
      %s292 = ssub.s32 %s13, 1
      %s293 = smul.u32 2, %s22
      %p294 = scmp.lt.s32.totalorder %s293, 3
      %s295 = scalar_select %p294, %s293, 3
      %s296 = smul.addr %s295, 4
      %s297 = scalar_lea.vmem %s0, %s296
      %p298 = pneg %p51
      %p299 = pneg %p48
      %p300 = scmp.lt.s32.totalorder %s22, 1
      %s301 = scalar_select %p300, %s22, 1
      %p302 = scmp.lt.s32.totalorder %s23, 1
      %s303 = scalar_select %p302, %s23, 1
      %s304 = smul.addr %s301, 2
      %s305 = sadd.s32 %s303, %s304
      %s306 = smul.addr %s305, 4
      %s307 = scalar_lea.vmem %s1, %s306
      %p308 = pneg %p79
      %p309 = pneg %p76
      %p310 = scmp.lt.s32.totalorder %s22, 1
      %s311 = scalar_select %p310, %s22, 1
      %s312 = smul.addr %s311, 2
      %s313 = smul.addr %s312, 4
      %s314 = scalar_lea.vmem %s2, %s313
      %p315 = pneg %p105
      %p316 = pneg %p102
      %p317 = pneg %p126
      %p318 = pneg %p123
      %p319 = pneg %p147
      %p320 = pneg %p144
      %s321 = smul.u32 16, %s23
      %p322 = scmp.lt.s32.totalorder %s321, 31
      %s323 = scalar_select %p322, %s321, 31
      %s324 = smul.addr %s323, 2
      %s325 = smul.addr %s324, 4
      %s326 = scalar_lea.vmem %s5, %s325
      %p327 = pneg %p173
      %p328 = pneg %p170
      %p329 = pneg %p194
      %p330 = pneg %p191
      %p331 = pneg %p220
      %p332 = pneg %p217
      %p333 = scmp.lt.s32.totalorder %s22, 1
      %s334 = scalar_select %p333, %s22, 1
      %s335 = smul.addr %s334, 2
      %s336 = smul.addr %s335, 4
      %s337 = scalar_lea.vmem %s7, %s336
      %s338 = smul.u32 2, %s22
      %p339 = scmp.lt.s32.totalorder %s338, 3
      %s340 = scalar_select %p339, %s338, 3
      %s341 = smul.addr %s340, 4
      %s342 = scalar_lea.vmem %s0, %s341
      %s343 = smul.u32 2, %s22
      %p344 = scmp.lt.s32.totalorder %s22, 1
      %s345 = scalar_select %p344, %s22, 1
      %p346 = scmp.lt.s32.totalorder %s23, 1
      %s347 = scalar_select %p346, %s23, 1
      %s348 = smul.addr %s345, 2
      %s349 = sadd.s32 %s347, %s348
      %s350 = smul.addr %s349, 4
      %s351 = scalar_lea.vmem %s1, %s350
      %p352 = scmp.lt.s32.totalorder %s22, 1
      %s353 = scalar_select %p352, %s22, 1
      %s354 = smul.addr %s353, 2
      %s355 = smul.addr %s354, 4
      %s356 = scalar_lea.vmem %s2, %s355
      %s357 = smul.u32 16, %s23
      %p358 = scmp.lt.s32.totalorder %s357, 31
      %s359 = scalar_select %p358, %s357, 31
      %s360 = smul.addr %s359, 2
      %s361 = smul.addr %s360, 4
      %s362 = scalar_lea.vmem %s5, %s361
      %s363 = smul.u32 16, %s23
      %p364 = scmp.lt.s32.totalorder %s22, 1
      %s365 = scalar_select %p364, %s22, 1
      %s366 = smul.addr %s365, 2
      %s367 = smul.addr %s366, 4
      %s368 = scalar_lea.vmem %s7, %s367
      %p370 = scmp.eq.s32.totalorder %s23, 0
      // Predicated region
      $region49: #{th_forward.1} parent=47 // pred_check
        %p371 = pneg %p370
      $region50: #{th_forward.1} parent=47 // pred_check_branch
        %373 = sbr.rel (%p371) target = $region52
      $region51: #{th_forward.1} parent=47 // pred_region
        %374 = vst [vmem:[#allocation2] sm:$0xff] 0.0
      $region52: #{th_forward.1} parent=47 // pred_fallthru
        _
      %v375 = vld [vmem:[#allocation2] sm:$0xff]
      %v376 = vld [vmem:[%s351] sm:$0xf]
      %v377 = vpack.c.bf16 %v376, %v376
      %v378 = vld [vmem:[%s362] sm:$0xff]
      %v379 = vld [vmem:[%s362 + $0x8] sm:$0xff]
      %v380 = vld [vmem:[%s362 + $0x10] sm:$0xff]
      %v381 = vld [vmem:[%s362 + $0x18] sm:$0xff]
      %v382 = vld [vmem:[%s362 + $0x20] sm:$0xff]
      %v383 = vld [vmem:[%s362 + $0x28] sm:$0xff]
      %v384 = vld [vmem:[%s362 + $0x30] sm:$0xff]
      %v385 = vld [vmem:[%s362 + $0x38] sm:$0xff]
      %v386 = vld [vmem:[%s362 + $0x40] sm:$0xff]
      %v387 = vld [vmem:[%s362 + $0x48] sm:$0xff]
      %v388 = vld [vmem:[%s362 + $0x50] sm:$0xff]
      %v389 = vld [vmem:[%s362 + $0x58] sm:$0xff]
      %v390 = vld [vmem:[%s362 + $0x60] sm:$0xff]
      %v391 = vld [vmem:[%s362 + $0x68] sm:$0xff]
      %v392 = vld [vmem:[%s362 + $0x70] sm:$0xff]
      %v393 = vld [vmem:[%s362 + $0x78] sm:$0xff]
      %v410 = vunpack.c.l.b16 %v378
      %v411 = vunpack.c.h.b16 %v378
      %v412 = vunpack.c.l.b16 %v379
      %v413 = vunpack.c.h.b16 %v379
      %v414 = vunpack.c.l.b16 %v380
      %v415 = vunpack.c.h.b16 %v380
      %v416 = vunpack.c.l.b16 %v381
      %v417 = vunpack.c.h.b16 %v381
      %v418 = vunpack.c.l.b16 %v382
      %v419 = vunpack.c.h.b16 %v382
      %v420 = vunpack.c.l.b16 %v383
      %v421 = vunpack.c.h.b16 %v383
      %v422 = vunpack.c.l.b16 %v384
      %v423 = vunpack.c.h.b16 %v384
      %v424 = vunpack.c.l.b16 %v385
      %v425 = vunpack.c.h.b16 %v385
      %v426 = vunpack.c.l.b16 %v386
      %v427 = vunpack.c.h.b16 %v386
      %v428 = vunpack.c.l.b16 %v387
      %v429 = vunpack.c.h.b16 %v387
      %v430 = vunpack.c.l.b16 %v388
      %v431 = vunpack.c.h.b16 %v388
      %v432 = vunpack.c.l.b16 %v389
      %v433 = vunpack.c.h.b16 %v389
      %v434 = vunpack.c.l.b16 %v390
      %v435 = vunpack.c.h.b16 %v390
      %v436 = vunpack.c.l.b16 %v391
      %v437 = vunpack.c.h.b16 %v391
      %v438 = vunpack.c.l.b16 %v392
      %v439 = vunpack.c.h.b16 %v392
      %v440 = vunpack.c.l.b16 %v393
      %v441 = vunpack.c.h.b16 %v393
      %v442 = vpack.c.b16 %v412, %v410
      %v443 = vpack.c.b16 %v413, %v411
      %v444 = vpack.c.b16 %v416, %v414
      %v445 = vpack.c.b16 %v417, %v415
      %v446 = vpack.c.b16 %v420, %v418
      %v447 = vpack.c.b16 %v421, %v419
      %v448 = vpack.c.b16 %v424, %v422
      %v449 = vpack.c.b16 %v425, %v423
      %v450 = vpack.c.b16 %v428, %v426
      %v451 = vpack.c.b16 %v429, %v427
      %v452 = vpack.c.b16 %v432, %v430
      %v453 = vpack.c.b16 %v433, %v431
      %v454 = vpack.c.b16 %v436, %v434
      %v455 = vpack.c.b16 %v437, %v435
      %v456 = vpack.c.b16 %v440, %v438
      %v457 = vpack.c.b16 %v441, %v439
      %474 = vmatprep.subr.bf16.mxu0 %v443
      %475 = vmatpush1.bf16.msra.mxu0 %v442
      %476 = vmatprep.subr.bf16.mxu0 %v445
      %477 = vmatpush1.bf16.msra.mxu0 %v444
      %478 = vmatprep.subr.bf16.mxu0 %v447
      %479 = vmatpush1.bf16.msra.mxu0 %v446
      %480 = vmatprep.subr.bf16.mxu0 %v449
      %481 = vmatpush1.bf16.msra.mxu0 %v448
      %482 = vmatprep.subr.bf16.mxu0 %v451
      %483 = vmatpush1.bf16.msra.mxu0 %v450
      %484 = vmatprep.subr.bf16.mxu0 %v453
      %485 = vmatpush1.bf16.msra.mxu0 %v452
      %486 = vmatprep.subr.bf16.mxu0 %v455
      %487 = vmatpush1.bf16.msra.mxu0 %v454
      %488 = vmatprep.subr.bf16.mxu0 %v457
      %489 = vmatpush1.bf16.msra.mxu0 %v456
      %490 = vmatprep.subr.bf16.mxu0 0
      %491 = vmatpush1.bf16.msra.mxu0 0
      %492 = vmatprep.subr.bf16.mxu0 0
      %493 = vmatpush1.bf16.msra.mxu0 0
      %494 = vmatprep.subr.bf16.mxu0 0
      %495 = vmatpush1.bf16.msra.mxu0 0
      %496 = vmatprep.subr.bf16.mxu0 0
      %497 = vmatpush1.bf16.msra.mxu0 0
      %498 = vmatprep.subr.bf16.mxu0 0
      %499 = vmatpush1.bf16.msra.mxu0 0
      %500 = vmatprep.subr.bf16.mxu0 0
      %501 = vmatpush1.bf16.msra.mxu0 0
      %502 = vmatprep.subr.bf16.mxu0 0
      %503 = vmatpush1.bf16.msra.mxu0 0
      %504 = vmatprep.subr.bf16.mxu0 0
      %505 = vmatpush1.bf16.msra.mxu0 0
      %506 = vmatprep.mubr.bf16.mxu0 0
      %507 = vmatmul.mubr.bf16.gmra.mrb[0].mxu0 %v377
      %v508 = vpop.f32.mrb[0].mxu0
      %v509 = vadd.f32 0.0, %v508
      %v510 = vpop.f32.mrb[0].mxu0
      %v511 = vadd.f32 0.0, %v510
      %v512 = vpop.f32.mrb[0].mxu0
      %v513 = vpop.f32.mrb[0].mxu0
      %514 = vdwg.mxu0
      %v517 = vcombine.low %v509, %v511
      %v519 = vadd.f32 %v375, %v517
      %520 = vst [vmem:[#allocation2] sm:$0xff] %v519
      %p521 = scmp.eq.s32.totalorder %s23, 1
      // Predicated region
      $region53: #{th_forward.1} parent=47 // pred_check
        %p522 = pneg %p521
      $region54: #{th_forward.1} parent=47 // pred_check_branch
        %524 = sbr.rel (%p522) target = $region56
      $region55: #{th_forward.1} parent=47 // pred_region
        %v525 = vld [vmem:[%s3] sm:$0xff]
        %v526 = vld [vmem:[%s3 + $0x8] sm:$0xf]
        %v527 = vld [vmem:[%s342] sm:$0xff]
        %v528 = vld [vmem:[%s4] sm:$0xff]
        %v529 = vld [vmem:[%s4 + $0x8] sm:$0xf]
        %531 = vset.pattern.permute.xlu0 0
        %532 = vperm.xlu0 %531, %v528
        %v533 = vpop.permute.xlu0 %532
        %536 = vset.pattern.permute.xlu0 0
        %537 = vperm.xlu0 %536, %v529
        %v538 = vpop.permute.xlu0 %537
        %v541 = vcombine.high %v527, %v527
        %vm542 = vcmask 31744
        %v544 = vsel %vm542, %v525, 0
        %v547 = vsel %vm542, %v526, 0
        %vm549 = vcmask 1043456
        %v550 = vsel %vm549, %v527, 0
        %v552 = vsel %vm549, %v541, 0
        %554 = vmatprep.subr.mxu0 %v552
        %555 = vmatpush1.msra.mxu0 %v550
        %556 = vmatprep.subr.mxu0 0.0
        %557 = vmatpush1.msra.mxu0 0.0
        %558 = vmatprep.subr.mxu0 0.0
        %559 = vmatpush1.msra.mxu0 0.0
        %560 = vmatprep.subr.mxu0 0.0
        %561 = vmatpush1.msra.mxu0 0.0
        %562 = vmatprep.subr.mxu0 0.0
        %563 = vmatpush1.msra.mxu0 0.0
        %564 = vmatprep.subr.mxu0 0.0
        %565 = vmatpush1.msra.mxu0 0.0
        %566 = vmatprep.subr.mxu0 0.0
        %567 = vmatpush1.msra.mxu0 0.0
        %568 = vmatprep.subr.mxu0 0.0
        %569 = vmatpush1.msra.mxu0 0.0
        %570 = vmatprep.subr.mxu0 0.0
        %571 = vmatpush1.msra.mxu0 0.0
        %572 = vmatprep.subr.mxu0 0.0
        %573 = vmatpush1.msra.mxu0 0.0
        %574 = vmatprep.subr.mxu0 0.0
        %575 = vmatpush1.msra.mxu0 0.0
        %576 = vmatprep.subr.mxu0 0.0
        %577 = vmatpush1.msra.mxu0 0.0
        %578 = vmatprep.subr.mxu0 0.0
        %579 = vmatpush1.msra.mxu0 0.0
        %580 = vmatprep.subr.mxu0 0.0
        %581 = vmatpush1.msra.mxu0 0.0
        %582 = vmatprep.subr.mxu0 0.0
        %583 = vmatpush1.msra.mxu0 0.0
        %584 = vmatprep.subr.mxu0 0.0
        %585 = vmatpush1.msra.mxu0 0.0
        %586 = vmatprep.subr.mxu0 0.0
        %587 = vmatpush1.msra.mxu0 0.0
        %588 = vmatprep.subr.mxu0 0.0
        %589 = vmatpush1.msra.mxu0 0.0
        %590 = vmatprep.subr.mxu0 0.0
        %591 = vmatpush1.msra.mxu0 0.0
        %592 = vmatprep.subr.mxu0 0.0
        %593 = vmatpush1.msra.mxu0 0.0
        %594 = vmatprep.subr.mxu0 0.0
        %595 = vmatpush1.msra.mxu0 0.0
        %596 = vmatprep.subr.mxu0 0.0
        %597 = vmatpush1.msra.mxu0 0.0
        %598 = vmatprep.subr.mxu0 0.0
        %599 = vmatpush1.msra.mxu0 0.0
        %600 = vmatprep.subr.mxu0 0.0
        %601 = vmatpush1.msra.mxu0 0.0
        %602 = vmatprep.subr.mxu0 0.0
        %603 = vmatpush1.msra.mxu0 0.0
        %604 = vmatprep.subr.mxu0 0.0
        %605 = vmatpush1.msra.mxu0 0.0
        %606 = vmatprep.subr.mxu0 0.0
        %607 = vmatpush1.msra.mxu0 0.0
        %608 = vmatprep.subr.mxu0 0.0
        %609 = vmatpush1.msra.mxu0 0.0
        %610 = vmatprep.subr.mxu0 0.0
        %611 = vmatpush1.msra.mxu0 0.0
        %612 = vmatprep.subr.mxu0 0.0
        %613 = vmatpush1.msra.mxu0 0.0
        %614 = vmatprep.subr.mxu0 0.0
        %615 = vmatpush1.msra.mxu0 0.0
        %616 = vmatprep.subr.mxu0 0.0
        %617 = vmatpush1.msra.mxu0 0.0
        %618 = vmatprep.mubr.f32.mxu0 0.0
        %619 = vmatmul.mubr.f32.gmra.mrb[0].mxu0 %v544
        %v620 = vpop.f32.mrb[0].mxu0
        %v621 = vadd.f32 %v533, %v620
        %v622 = vpop.f32.mrb[0].mxu0
        %v623 = vadd.f32 %v533, %v622
        %624 = vmatprep.mubr.f32.mxu0 0.0
        %625 = vmatmul.mubr.f32.gmra.mrb[0].mxu0 %v547
        %v626 = vpop.f32.mrb[0].mxu0
        %v627 = vadd.f32 %v538, %v626
        %v628 = vpop.f32.mrb[0].mxu0
        %v629 = vadd.f32 %v538, %v628
        %630 = vdwg.mxu0
        %633 = vrot.lane.b32.xlu0 %v621, 64
        %v634 = vpop.permute.xlu0 %633
        %635 = vrot.lane.b32.xlu0 %v627, 64
        %v636 = vpop.permute.xlu0 %635
        %641 = vrot.lane.b32.xlu0 %v623, 64
        %v642 = vpop.permute.xlu0 %641
        %643 = vrot.lane.b32.xlu0 %v629, 64
        %v644 = vpop.permute.xlu0 %643
        %v647 = vcombine.low %v621, %v623
        %v648 = vcombine.high %v621, %v623
        %v650 = vunpack.c.l.s4 1983009808
        %v651 = vunpack.c.0.s8 %v650
        %v652 = vlaneseq
        %v653 = vshrl.u32 %v652, 7
        %v654 = vsub.s32 %v651, %v653
        %v655 = vrot.slane %v647, %v654
        %v657 = vunpack.c.l.s4 1983009808
        %v658 = vunpack.c.0.s8 %v657
        %v659 = vlaneseq
        %v660 = vshrl.u32 %v659, 7
        %v661 = vsub.s32 %v658, %v660
        %v662 = vrot.slane %v648, %v661
        %v663 = vcombine.low %v634, %v642
        %v664 = vcombine.high %v634, %v642
        %v666 = vunpack.c.l.s4 1983009808
        %v667 = vunpack.c.0.s8 %v666
        %v668 = vlaneseq
        %v669 = vshrl.u32 %v668, 7
        %v670 = vsub.s32 %v667, %v669
        %v671 = vrot.slane %v663, %v670
        %v673 = vunpack.c.l.s4 1983009808
        %v674 = vunpack.c.0.s8 %v673
        %v675 = vlaneseq
        %v676 = vshrl.u32 %v675, 7
        %v677 = vsub.s32 %v674, %v676
        %v678 = vrot.slane %v664, %v677
        %v679 = vcombine.low %v655, %v671
        %v680 = vcombine.high %v655, %v671
        %v682 = vunpack.c.l.s4 1934713408
        %v683 = vunpack.c.0.s8 %v682
        %v684 = vlaneseq
        %v685 = vshrl.u32 %v684, 7
        %v686 = vsub.s32 %v683, %v685
        %v687 = vrot.slane %v679, %v686
        %v689 = vunpack.c.l.s4 1934713408
        %v690 = vunpack.c.0.s8 %v689
        %v691 = vlaneseq
        %v692 = vshrl.u32 %v691, 7
        %v693 = vsub.s32 %v690, %v692
        %v694 = vrot.slane %v680, %v693
        %v695 = vcombine.low %v662, %v678
        %v696 = vcombine.high %v662, %v678
        %v698 = vunpack.c.l.s4 1934713408
        %v699 = vunpack.c.0.s8 %v698
        %v700 = vlaneseq
        %v701 = vshrl.u32 %v700, 7
        %v702 = vsub.s32 %v699, %v701
        %v703 = vrot.slane %v695, %v702
        %v705 = vunpack.c.l.s4 1934713408
        %v706 = vunpack.c.0.s8 %v705
        %v707 = vlaneseq
        %v708 = vshrl.u32 %v707, 7
        %v709 = vsub.s32 %v706, %v708
        %v710 = vrot.slane %v696, %v709
        %v711 = vcombine.high %v687, 0.0
        %v712 = vcombine.high %v694, 0.0
        %v713 = vcombine.high %v703, 0.0
        %v714 = vcombine.high %v710, 0.0
        %v715 = vcombine.low %v627, %v629
        %v717 = vunpack.c.l.s4 1983009808
        %v718 = vunpack.c.0.s8 %v717
        %v719 = vlaneseq
        %v720 = vshrl.u32 %v719, 7
        %v721 = vsub.s32 %v718, %v720
        %v722 = vrot.slane %v715, %v721
        %v723 = vcombine.low %v636, %v644
        %v725 = vunpack.c.l.s4 1983009808
        %v726 = vunpack.c.0.s8 %v725
        %v727 = vlaneseq
        %v728 = vshrl.u32 %v727, 7
        %v729 = vsub.s32 %v726, %v728
        %v730 = vrot.slane %v723, %v729
        %v731 = vcombine.low %v722, %v730
        %v732 = vcombine.high %v722, %v730
        %v734 = vunpack.c.l.s4 1934713408
        %v735 = vunpack.c.0.s8 %v734
        %v736 = vlaneseq
        %v737 = vshrl.u32 %v736, 7
        %v738 = vsub.s32 %v735, %v737
        %v739 = vrot.slane %v731, %v738
        %v741 = vunpack.c.l.s4 1934713408
        %v742 = vunpack.c.0.s8 %v741
        %v743 = vlaneseq
        %v744 = vshrl.u32 %v743, 7
        %v745 = vsub.s32 %v742, %v744
        %v746 = vrot.slane %v732, %v745
        %v747 = vcombine.high %v739, 0.0
        %v748 = vcombine.high %v746, 0.0
        %v749 = vlaneseq
        %v750 = vshrl.u32 %v749, 7
        %v751 = vsub.s32 0, %v750
        %v752 = vrot.slane %v687, %v751
        %754 = vbcast.lane.b32.xlu0 %v752, 256
        %v755 = vpop.permute.xlu0 %754
        %s757 = sor.u32 256, 8
        %758 = vbcast.lane.b32.xlu0 %v752, %s757
        %v759 = vpop.permute.xlu0 %758
        %s761 = sor.u32 256, 16
        %762 = vbcast.lane.b32.xlu0 %v752, %s761
        %v763 = vpop.permute.xlu0 %762
        %s765 = sor.u32 256, 24
        %766 = vbcast.lane.b32.xlu0 %v752, %s765
        %v767 = vpop.permute.xlu0 %766
        %s769 = sor.u32 256, 32
        %770 = vbcast.lane.b32.xlu0 %v752, %s769
        %v771 = vpop.permute.xlu0 %770
        %s773 = sor.u32 256, 40
        %774 = vbcast.lane.b32.xlu0 %v752, %s773
        %v775 = vpop.permute.xlu0 %774
        %s777 = sor.u32 256, 48
        %778 = vbcast.lane.b32.xlu0 %v752, %s777
        %v779 = vpop.permute.xlu0 %778
        %s781 = sor.u32 256, 56
        %782 = vbcast.lane.b32.xlu0 %v752, %s781
        %v783 = vpop.permute.xlu0 %782
        %v784 = vlaneseq
        %v785 = vshrl.u32 %v784, 7
        %v786 = vsub.s32 1, %v785
        %v787 = vrot.slane %v687, %v786
        %789 = vbcast.lane.b32.xlu0 %v787, 256
        %v790 = vpop.permute.xlu0 %789
        %s792 = sor.u32 256, 8
        %793 = vbcast.lane.b32.xlu0 %v787, %s792
        %v794 = vpop.permute.xlu0 %793
        %s796 = sor.u32 256, 16
        %797 = vbcast.lane.b32.xlu0 %v787, %s796
        %v798 = vpop.permute.xlu0 %797
        %s800 = sor.u32 256, 24
        %801 = vbcast.lane.b32.xlu0 %v787, %s800
        %v802 = vpop.permute.xlu0 %801
        %s804 = sor.u32 256, 32
        %805 = vbcast.lane.b32.xlu0 %v787, %s804
        %v806 = vpop.permute.xlu0 %805
        %s808 = sor.u32 256, 40
        %809 = vbcast.lane.b32.xlu0 %v787, %s808
        %v810 = vpop.permute.xlu0 %809
        %s812 = sor.u32 256, 48
        %813 = vbcast.lane.b32.xlu0 %v787, %s812
        %v814 = vpop.permute.xlu0 %813
        %s816 = sor.u32 256, 56
        %817 = vbcast.lane.b32.xlu0 %v787, %s816
        %v818 = vpop.permute.xlu0 %817
        %v819 = vlaneseq
        %v820 = vshrl.u32 %v819, 7
        %v821 = vsub.s32 2, %v820
        %v822 = vrot.slane %v687, %v821
        %824 = vbcast.lane.b32.xlu0 %v822, 256
        %v825 = vpop.permute.xlu0 %824
        %s827 = sor.u32 256, 8
        %828 = vbcast.lane.b32.xlu0 %v822, %s827
        %v829 = vpop.permute.xlu0 %828
        %s831 = sor.u32 256, 16
        %832 = vbcast.lane.b32.xlu0 %v822, %s831
        %v833 = vpop.permute.xlu0 %832
        %s835 = sor.u32 256, 24
        %836 = vbcast.lane.b32.xlu0 %v822, %s835
        %v837 = vpop.permute.xlu0 %836
        %s839 = sor.u32 256, 32
        %840 = vbcast.lane.b32.xlu0 %v822, %s839
        %v841 = vpop.permute.xlu0 %840
        %s843 = sor.u32 256, 40
        %844 = vbcast.lane.b32.xlu0 %v822, %s843
        %v845 = vpop.permute.xlu0 %844
        %s847 = sor.u32 256, 48
        %848 = vbcast.lane.b32.xlu0 %v822, %s847
        %v849 = vpop.permute.xlu0 %848
        %s851 = sor.u32 256, 56
        %852 = vbcast.lane.b32.xlu0 %v822, %s851
        %v853 = vpop.permute.xlu0 %852
        %v854 = vlaneseq
        %v855 = vshrl.u32 %v854, 7
        %v856 = vsub.s32 3, %v855
        %v857 = vrot.slane %v687, %v856
        %859 = vbcast.lane.b32.xlu0 %v857, 256
        %v860 = vpop.permute.xlu0 %859
        %s862 = sor.u32 256, 8
        %863 = vbcast.lane.b32.xlu0 %v857, %s862
        %v864 = vpop.permute.xlu0 %863
        %s866 = sor.u32 256, 16
        %867 = vbcast.lane.b32.xlu0 %v857, %s866
        %v868 = vpop.permute.xlu0 %867
        %s870 = sor.u32 256, 24
        %871 = vbcast.lane.b32.xlu0 %v857, %s870
        %v872 = vpop.permute.xlu0 %871
        %s874 = sor.u32 256, 32
        %875 = vbcast.lane.b32.xlu0 %v857, %s874
        %v876 = vpop.permute.xlu0 %875
        %s878 = sor.u32 256, 40
        %879 = vbcast.lane.b32.xlu0 %v857, %s878
        %v880 = vpop.permute.xlu0 %879
        %s882 = sor.u32 256, 48
        %883 = vbcast.lane.b32.xlu0 %v857, %s882
        %v884 = vpop.permute.xlu0 %883
        %s886 = sor.u32 256, 56
        %887 = vbcast.lane.b32.xlu0 %v857, %s886
        %v888 = vpop.permute.xlu0 %887
        %v891 = vunpack.c.l.s4 1966171168
        %v892 = vunpack.c.0.s8 %v891
        %v893 = vlaneseq
        %v894 = vshrl.u32 %v893, 7
        %v895 = vsub.s32 %v892, %v894
        %v896 = vrot.slane %v703, %v895
        %v897 = vcombine.high %v896, %v896
        %v899 = vunpack.c.l.s4 1966171168
        %v900 = vunpack.c.0.s8 %v899
        %v901 = vlaneseq
        %v902 = vshrl.u32 %v901, 7
        %v903 = vsub.s32 %v900, %v902
        %v904 = vrot.slane %v896, %v903
        %v906 = vunpack.c.l.s4 1966171168
        %v907 = vunpack.c.0.s8 %v906
        %v908 = vlaneseq
        %v909 = vshrl.u32 %v908, 7
        %v910 = vsub.s32 %v907, %v909
        %v911 = vrot.slane %v897, %v910
        %v912 = vcombine.high %v904, %v904
        %v913 = vcombine.high %v911, %v911
        %v914 = vlaneseq
        %v915 = vshrl.u32 %v914, 7
        %v916 = vsub.s32 0, %v915
        %v917 = vrot.slane %v904, %v916
        %v918 = vlaneseq
        %v919 = vshrl.u32 %v918, 7
        %v920 = vsub.s32 0, %v919
        %v921 = vrot.slane %v911, %v920
        %v922 = vlaneseq
        %v923 = vshrl.u32 %v922, 7
        %v924 = vsub.s32 0, %v923
        %v925 = vrot.slane %v912, %v924
        %v926 = vlaneseq
        %v927 = vshrl.u32 %v926, 7
        %v928 = vsub.s32 0, %v927
        %v929 = vrot.slane %v913, %v928
        %v934 = vmul.f32 %v755, %v917
        %v935 = vmul.f32 %v759, %v917
        %v936 = vmul.f32 %v763, %v917
        %v937 = vmul.f32 %v767, %v917
        %v938 = vmul.f32 %v771, %v917
        %v939 = vmul.f32 %v775, %v917
        %v940 = vmul.f32 %v779, %v917
        %v941 = vmul.f32 %v783, %v917
        %v942 = vmul.f32 %v790, %v921
        %v943 = vmul.f32 %v794, %v921
        %v944 = vmul.f32 %v798, %v921
        %v945 = vmul.f32 %v802, %v921
        %v946 = vmul.f32 %v806, %v921
        %v947 = vmul.f32 %v810, %v921
        %v948 = vmul.f32 %v814, %v921
        %v949 = vmul.f32 %v818, %v921
        %v950 = vmul.f32 %v825, %v925
        %v951 = vmul.f32 %v829, %v925
        %v952 = vmul.f32 %v833, %v925
        %v953 = vmul.f32 %v837, %v925
        %v954 = vmul.f32 %v841, %v925
        %v955 = vmul.f32 %v845, %v925
        %v956 = vmul.f32 %v849, %v925
        %v957 = vmul.f32 %v853, %v925
        %v958 = vmul.f32 %v860, %v929
        %v959 = vmul.f32 %v864, %v929
        %v960 = vmul.f32 %v868, %v929
        %v961 = vmul.f32 %v872, %v929
        %v962 = vmul.f32 %v876, %v929
        %v963 = vmul.f32 %v880, %v929
        %v964 = vmul.f32 %v884, %v929
        %v965 = vmul.f32 %v888, %v929
        %v966 = vlaneseq
        %v967 = vshrl.u32 %v966, 7
        %v968 = vsub.s32 0, %v967
        %v969 = vrot.slane %v711, %v968
        %971 = vbcast.lane.b32.xlu0 %v969, 256
        %v972 = vpop.permute.xlu0 %971
        %s974 = sor.u32 256, 8
        %975 = vbcast.lane.b32.xlu0 %v969, %s974
        %v976 = vpop.permute.xlu0 %975
        %s978 = sor.u32 256, 16
        %979 = vbcast.lane.b32.xlu0 %v969, %s978
        %v980 = vpop.permute.xlu0 %979
        %s982 = sor.u32 256, 24
        %983 = vbcast.lane.b32.xlu0 %v969, %s982
        %v984 = vpop.permute.xlu0 %983
        %s986 = sor.u32 256, 32
        %987 = vbcast.lane.b32.xlu0 %v969, %s986
        %v988 = vpop.permute.xlu0 %987
        %s990 = sor.u32 256, 40
        %991 = vbcast.lane.b32.xlu0 %v969, %s990
        %v992 = vpop.permute.xlu0 %991
        %s994 = sor.u32 256, 48
        %995 = vbcast.lane.b32.xlu0 %v969, %s994
        %v996 = vpop.permute.xlu0 %995
        %s998 = sor.u32 256, 56
        %999 = vbcast.lane.b32.xlu0 %v969, %s998
        %v1000 = vpop.permute.xlu0 %999
        %v1001 = vlaneseq
        %v1002 = vshrl.u32 %v1001, 7
        %v1003 = vsub.s32 1, %v1002
        %v1004 = vrot.slane %v711, %v1003
        %1006 = vbcast.lane.b32.xlu0 %v1004, 256
        %v1007 = vpop.permute.xlu0 %1006
        %s1009 = sor.u32 256, 8
        %1010 = vbcast.lane.b32.xlu0 %v1004, %s1009
        %v1011 = vpop.permute.xlu0 %1010
        %s1013 = sor.u32 256, 16
        %1014 = vbcast.lane.b32.xlu0 %v1004, %s1013
        %v1015 = vpop.permute.xlu0 %1014
        %s1017 = sor.u32 256, 24
        %1018 = vbcast.lane.b32.xlu0 %v1004, %s1017
        %v1019 = vpop.permute.xlu0 %1018
        %s1021 = sor.u32 256, 32
        %1022 = vbcast.lane.b32.xlu0 %v1004, %s1021
        %v1023 = vpop.permute.xlu0 %1022
        %s1025 = sor.u32 256, 40
        %1026 = vbcast.lane.b32.xlu0 %v1004, %s1025
        %v1027 = vpop.permute.xlu0 %1026
        %s1029 = sor.u32 256, 48
        %1030 = vbcast.lane.b32.xlu0 %v1004, %s1029
        %v1031 = vpop.permute.xlu0 %1030
        %s1033 = sor.u32 256, 56
        %1034 = vbcast.lane.b32.xlu0 %v1004, %s1033
        %v1035 = vpop.permute.xlu0 %1034
        %v1036 = vlaneseq
        %v1037 = vshrl.u32 %v1036, 7
        %v1038 = vsub.s32 2, %v1037
        %v1039 = vrot.slane %v711, %v1038
        %1041 = vbcast.lane.b32.xlu0 %v1039, 256
        %v1042 = vpop.permute.xlu0 %1041
        %s1044 = sor.u32 256, 8
        %1045 = vbcast.lane.b32.xlu0 %v1039, %s1044
        %v1046 = vpop.permute.xlu0 %1045
        %s1048 = sor.u32 256, 16
        %1049 = vbcast.lane.b32.xlu0 %v1039, %s1048
        %v1050 = vpop.permute.xlu0 %1049
        %s1052 = sor.u32 256, 24
        %1053 = vbcast.lane.b32.xlu0 %v1039, %s1052
        %v1054 = vpop.permute.xlu0 %1053
        %s1056 = sor.u32 256, 32
        %1057 = vbcast.lane.b32.xlu0 %v1039, %s1056
        %v1058 = vpop.permute.xlu0 %1057
        %s1060 = sor.u32 256, 40
        %1061 = vbcast.lane.b32.xlu0 %v1039, %s1060
        %v1062 = vpop.permute.xlu0 %1061
        %s1064 = sor.u32 256, 48
        %1065 = vbcast.lane.b32.xlu0 %v1039, %s1064
        %v1066 = vpop.permute.xlu0 %1065
        %s1068 = sor.u32 256, 56
        %1069 = vbcast.lane.b32.xlu0 %v1039, %s1068
        %v1070 = vpop.permute.xlu0 %1069
        %v1071 = vlaneseq
        %v1072 = vshrl.u32 %v1071, 7
        %v1073 = vsub.s32 3, %v1072
        %v1074 = vrot.slane %v711, %v1073
        %1076 = vbcast.lane.b32.xlu0 %v1074, 256
        %v1077 = vpop.permute.xlu0 %1076
        %s1079 = sor.u32 256, 8
        %1080 = vbcast.lane.b32.xlu0 %v1074, %s1079
        %v1081 = vpop.permute.xlu0 %1080
        %s1083 = sor.u32 256, 16
        %1084 = vbcast.lane.b32.xlu0 %v1074, %s1083
        %v1085 = vpop.permute.xlu0 %1084
        %s1087 = sor.u32 256, 24
        %1088 = vbcast.lane.b32.xlu0 %v1074, %s1087
        %v1089 = vpop.permute.xlu0 %1088
        %s1091 = sor.u32 256, 32
        %1092 = vbcast.lane.b32.xlu0 %v1074, %s1091
        %v1093 = vpop.permute.xlu0 %1092
        %s1095 = sor.u32 256, 40
        %1096 = vbcast.lane.b32.xlu0 %v1074, %s1095
        %v1097 = vpop.permute.xlu0 %1096
        %s1099 = sor.u32 256, 48
        %1100 = vbcast.lane.b32.xlu0 %v1074, %s1099
        %v1101 = vpop.permute.xlu0 %1100
        %s1103 = sor.u32 256, 56
        %1104 = vbcast.lane.b32.xlu0 %v1074, %s1103
        %v1105 = vpop.permute.xlu0 %1104
        %v1108 = vunpack.c.l.s4 1966171168
        %v1109 = vunpack.c.0.s8 %v1108
        %v1110 = vlaneseq
        %v1111 = vshrl.u32 %v1110, 7
        %v1112 = vsub.s32 %v1109, %v1111
        %v1113 = vrot.slane %v713, %v1112
        %v1114 = vcombine.high %v1113, %v1113
        %v1116 = vunpack.c.l.s4 1966171168
        %v1117 = vunpack.c.0.s8 %v1116
        %v1118 = vlaneseq
        %v1119 = vshrl.u32 %v1118, 7
        %v1120 = vsub.s32 %v1117, %v1119
        %v1121 = vrot.slane %v1113, %v1120
        %v1123 = vunpack.c.l.s4 1966171168
        %v1124 = vunpack.c.0.s8 %v1123
        %v1125 = vlaneseq
        %v1126 = vshrl.u32 %v1125, 7
        %v1127 = vsub.s32 %v1124, %v1126
        %v1128 = vrot.slane %v1114, %v1127
        %v1129 = vcombine.high %v1121, %v1121
        %v1130 = vcombine.high %v1128, %v1128
        %v1131 = vlaneseq
        %v1132 = vshrl.u32 %v1131, 7
        %v1133 = vsub.s32 0, %v1132
        %v1134 = vrot.slane %v1121, %v1133
        %v1135 = vlaneseq
        %v1136 = vshrl.u32 %v1135, 7
        %v1137 = vsub.s32 0, %v1136
        %v1138 = vrot.slane %v1128, %v1137
        %v1139 = vlaneseq
        %v1140 = vshrl.u32 %v1139, 7
        %v1141 = vsub.s32 0, %v1140
        %v1142 = vrot.slane %v1129, %v1141
        %v1143 = vlaneseq
        %v1144 = vshrl.u32 %v1143, 7
        %v1145 = vsub.s32 0, %v1144
        %v1146 = vrot.slane %v1130, %v1145
        %v1151 = vmul.f32 %v972, %v1134
        %v1152 = vmul.f32 %v976, %v1134
        %v1153 = vmul.f32 %v980, %v1134
        %v1154 = vmul.f32 %v984, %v1134
        %v1155 = vmul.f32 %v988, %v1134
        %v1156 = vmul.f32 %v992, %v1134
        %v1157 = vmul.f32 %v996, %v1134
        %v1158 = vmul.f32 %v1000, %v1134
        %v1159 = vmul.f32 %v1007, %v1138
        %v1160 = vmul.f32 %v1011, %v1138
        %v1161 = vmul.f32 %v1015, %v1138
        %v1162 = vmul.f32 %v1019, %v1138
        %v1163 = vmul.f32 %v1023, %v1138
        %v1164 = vmul.f32 %v1027, %v1138
        %v1165 = vmul.f32 %v1031, %v1138
        %v1166 = vmul.f32 %v1035, %v1138
        %v1167 = vmul.f32 %v1042, %v1142
        %v1168 = vmul.f32 %v1046, %v1142
        %v1169 = vmul.f32 %v1050, %v1142
        %v1170 = vmul.f32 %v1054, %v1142
        %v1171 = vmul.f32 %v1058, %v1142
        %v1172 = vmul.f32 %v1062, %v1142
        %v1173 = vmul.f32 %v1066, %v1142
        %v1174 = vmul.f32 %v1070, %v1142
        %v1175 = vmul.f32 %v1077, %v1146
        %v1176 = vmul.f32 %v1081, %v1146
        %v1177 = vmul.f32 %v1085, %v1146
        %v1178 = vmul.f32 %v1089, %v1146
        %v1179 = vmul.f32 %v1093, %v1146
        %v1180 = vmul.f32 %v1097, %v1146
        %v1181 = vmul.f32 %v1101, %v1146
        %v1182 = vmul.f32 %v1105, %v1146
        %v1183 = vadd.f32 %v934, %v1151
        %v1184 = vadd.f32 %v935, %v1152
        %v1185 = vadd.f32 %v936, %v1153
        %v1186 = vadd.f32 %v937, %v1154
        %v1187 = vadd.f32 %v938, %v1155
        %v1188 = vadd.f32 %v939, %v1156
        %v1189 = vadd.f32 %v940, %v1157
        %v1190 = vadd.f32 %v941, %v1158
        %v1191 = vadd.f32 %v942, %v1159
        %v1192 = vadd.f32 %v943, %v1160
        %v1193 = vadd.f32 %v944, %v1161
        %v1194 = vadd.f32 %v945, %v1162
        %v1195 = vadd.f32 %v946, %v1163
        %v1196 = vadd.f32 %v947, %v1164
        %v1197 = vadd.f32 %v948, %v1165
        %v1198 = vadd.f32 %v949, %v1166
        %v1199 = vadd.f32 %v950, %v1167
        %v1200 = vadd.f32 %v951, %v1168
        %v1201 = vadd.f32 %v952, %v1169
        %v1202 = vadd.f32 %v953, %v1170
        %v1203 = vadd.f32 %v954, %v1171
        %v1204 = vadd.f32 %v955, %v1172
        %v1205 = vadd.f32 %v956, %v1173
        %v1206 = vadd.f32 %v957, %v1174
        %v1207 = vadd.f32 %v958, %v1175
        %v1208 = vadd.f32 %v959, %v1176
        %v1209 = vadd.f32 %v960, %v1177
        %v1210 = vadd.f32 %v961, %v1178
        %v1211 = vadd.f32 %v962, %v1179
        %v1212 = vadd.f32 %v963, %v1180
        %v1213 = vadd.f32 %v964, %v1181
        %v1214 = vadd.f32 %v965, %v1182
        %v1215 = vlaneseq
        %v1216 = vshrl.u32 %v1215, 7
        %v1217 = vsub.s32 0, %v1216
        %v1218 = vrot.slane %v694, %v1217
        %1220 = vbcast.lane.b32.xlu0 %v1218, 256
        %v1221 = vpop.permute.xlu0 %1220
        %s1223 = sor.u32 256, 8
        %1224 = vbcast.lane.b32.xlu0 %v1218, %s1223
        %v1225 = vpop.permute.xlu0 %1224
        %s1227 = sor.u32 256, 16
        %1228 = vbcast.lane.b32.xlu0 %v1218, %s1227
        %v1229 = vpop.permute.xlu0 %1228
        %s1231 = sor.u32 256, 24
        %1232 = vbcast.lane.b32.xlu0 %v1218, %s1231
        %v1233 = vpop.permute.xlu0 %1232
        %s1235 = sor.u32 256, 32
        %1236 = vbcast.lane.b32.xlu0 %v1218, %s1235
        %v1237 = vpop.permute.xlu0 %1236
        %s1239 = sor.u32 256, 40
        %1240 = vbcast.lane.b32.xlu0 %v1218, %s1239
        %v1241 = vpop.permute.xlu0 %1240
        %s1243 = sor.u32 256, 48
        %1244 = vbcast.lane.b32.xlu0 %v1218, %s1243
        %v1245 = vpop.permute.xlu0 %1244
        %s1247 = sor.u32 256, 56
        %1248 = vbcast.lane.b32.xlu0 %v1218, %s1247
        %v1249 = vpop.permute.xlu0 %1248
        %v1250 = vlaneseq
        %v1251 = vshrl.u32 %v1250, 7
        %v1252 = vsub.s32 1, %v1251
        %v1253 = vrot.slane %v694, %v1252
        %1255 = vbcast.lane.b32.xlu0 %v1253, 256
        %v1256 = vpop.permute.xlu0 %1255
        %s1258 = sor.u32 256, 8
        %1259 = vbcast.lane.b32.xlu0 %v1253, %s1258
        %v1260 = vpop.permute.xlu0 %1259
        %s1262 = sor.u32 256, 16
        %1263 = vbcast.lane.b32.xlu0 %v1253, %s1262
        %v1264 = vpop.permute.xlu0 %1263
        %s1266 = sor.u32 256, 24
        %1267 = vbcast.lane.b32.xlu0 %v1253, %s1266
        %v1268 = vpop.permute.xlu0 %1267
        %s1270 = sor.u32 256, 32
        %1271 = vbcast.lane.b32.xlu0 %v1253, %s1270
        %v1272 = vpop.permute.xlu0 %1271
        %s1274 = sor.u32 256, 40
        %1275 = vbcast.lane.b32.xlu0 %v1253, %s1274
        %v1276 = vpop.permute.xlu0 %1275
        %s1278 = sor.u32 256, 48
        %1279 = vbcast.lane.b32.xlu0 %v1253, %s1278
        %v1280 = vpop.permute.xlu0 %1279
        %s1282 = sor.u32 256, 56
        %1283 = vbcast.lane.b32.xlu0 %v1253, %s1282
        %v1284 = vpop.permute.xlu0 %1283
        %v1285 = vlaneseq
        %v1286 = vshrl.u32 %v1285, 7
        %v1287 = vsub.s32 2, %v1286
        %v1288 = vrot.slane %v694, %v1287
        %1290 = vbcast.lane.b32.xlu0 %v1288, 256
        %v1291 = vpop.permute.xlu0 %1290
        %s1293 = sor.u32 256, 8
        %1294 = vbcast.lane.b32.xlu0 %v1288, %s1293
        %v1295 = vpop.permute.xlu0 %1294
        %s1297 = sor.u32 256, 16
        %1298 = vbcast.lane.b32.xlu0 %v1288, %s1297
        %v1299 = vpop.permute.xlu0 %1298
        %s1301 = sor.u32 256, 24
        %1302 = vbcast.lane.b32.xlu0 %v1288, %s1301
        %v1303 = vpop.permute.xlu0 %1302
        %s1305 = sor.u32 256, 32
        %1306 = vbcast.lane.b32.xlu0 %v1288, %s1305
        %v1307 = vpop.permute.xlu0 %1306
        %s1309 = sor.u32 256, 40
        %1310 = vbcast.lane.b32.xlu0 %v1288, %s1309
        %v1311 = vpop.permute.xlu0 %1310
        %s1313 = sor.u32 256, 48
        %1314 = vbcast.lane.b32.xlu0 %v1288, %s1313
        %v1315 = vpop.permute.xlu0 %1314
        %s1317 = sor.u32 256, 56
        %1318 = vbcast.lane.b32.xlu0 %v1288, %s1317
        %v1319 = vpop.permute.xlu0 %1318
        %v1320 = vlaneseq
        %v1321 = vshrl.u32 %v1320, 7
        %v1322 = vsub.s32 3, %v1321
        %v1323 = vrot.slane %v694, %v1322
        %1325 = vbcast.lane.b32.xlu0 %v1323, 256
        %v1326 = vpop.permute.xlu0 %1325
        %s1328 = sor.u32 256, 8
        %1329 = vbcast.lane.b32.xlu0 %v1323, %s1328
        %v1330 = vpop.permute.xlu0 %1329
        %s1332 = sor.u32 256, 16
        %1333 = vbcast.lane.b32.xlu0 %v1323, %s1332
        %v1334 = vpop.permute.xlu0 %1333
        %s1336 = sor.u32 256, 24
        %1337 = vbcast.lane.b32.xlu0 %v1323, %s1336
        %v1338 = vpop.permute.xlu0 %1337
        %s1340 = sor.u32 256, 32
        %1341 = vbcast.lane.b32.xlu0 %v1323, %s1340
        %v1342 = vpop.permute.xlu0 %1341
        %s1344 = sor.u32 256, 40
        %1345 = vbcast.lane.b32.xlu0 %v1323, %s1344
        %v1346 = vpop.permute.xlu0 %1345
        %s1348 = sor.u32 256, 48
        %1349 = vbcast.lane.b32.xlu0 %v1323, %s1348
        %v1350 = vpop.permute.xlu0 %1349
        %s1352 = sor.u32 256, 56
        %1353 = vbcast.lane.b32.xlu0 %v1323, %s1352
        %v1354 = vpop.permute.xlu0 %1353
        %v1357 = vunpack.c.l.s4 1966171168
        %v1358 = vunpack.c.0.s8 %v1357
        %v1359 = vlaneseq
        %v1360 = vshrl.u32 %v1359, 7
        %v1361 = vsub.s32 %v1358, %v1360
        %v1362 = vrot.slane %v710, %v1361
        %v1363 = vcombine.high %v1362, %v1362
        %v1365 = vunpack.c.l.s4 1966171168
        %v1366 = vunpack.c.0.s8 %v1365
        %v1367 = vlaneseq
        %v1368 = vshrl.u32 %v1367, 7
        %v1369 = vsub.s32 %v1366, %v1368
        %v1370 = vrot.slane %v1362, %v1369
        %v1372 = vunpack.c.l.s4 1966171168
        %v1373 = vunpack.c.0.s8 %v1372
        %v1374 = vlaneseq
        %v1375 = vshrl.u32 %v1374, 7
        %v1376 = vsub.s32 %v1373, %v1375
        %v1377 = vrot.slane %v1363, %v1376
        %v1378 = vcombine.high %v1370, %v1370
        %v1379 = vcombine.high %v1377, %v1377
        %v1380 = vlaneseq
        %v1381 = vshrl.u32 %v1380, 7
        %v1382 = vsub.s32 0, %v1381
        %v1383 = vrot.slane %v1370, %v1382
        %v1384 = vlaneseq
        %v1385 = vshrl.u32 %v1384, 7
        %v1386 = vsub.s32 0, %v1385
        %v1387 = vrot.slane %v1377, %v1386
        %v1388 = vlaneseq
        %v1389 = vshrl.u32 %v1388, 7
        %v1390 = vsub.s32 0, %v1389
        %v1391 = vrot.slane %v1378, %v1390
        %v1392 = vlaneseq
        %v1393 = vshrl.u32 %v1392, 7
        %v1394 = vsub.s32 0, %v1393
        %v1395 = vrot.slane %v1379, %v1394
        %v1400 = vmul.f32 %v1221, %v1383
        %v1401 = vmul.f32 %v1225, %v1383
        %v1402 = vmul.f32 %v1229, %v1383
        %v1403 = vmul.f32 %v1233, %v1383
        %v1404 = vmul.f32 %v1237, %v1383
        %v1405 = vmul.f32 %v1241, %v1383
        %v1406 = vmul.f32 %v1245, %v1383
        %v1407 = vmul.f32 %v1249, %v1383
        %v1408 = vmul.f32 %v1256, %v1387
        %v1409 = vmul.f32 %v1260, %v1387
        %v1410 = vmul.f32 %v1264, %v1387
        %v1411 = vmul.f32 %v1268, %v1387
        %v1412 = vmul.f32 %v1272, %v1387
        %v1413 = vmul.f32 %v1276, %v1387
        %v1414 = vmul.f32 %v1280, %v1387
        %v1415 = vmul.f32 %v1284, %v1387
        %v1416 = vmul.f32 %v1291, %v1391
        %v1417 = vmul.f32 %v1295, %v1391
        %v1418 = vmul.f32 %v1299, %v1391
        %v1419 = vmul.f32 %v1303, %v1391
        %v1420 = vmul.f32 %v1307, %v1391
        %v1421 = vmul.f32 %v1311, %v1391
        %v1422 = vmul.f32 %v1315, %v1391
        %v1423 = vmul.f32 %v1319, %v1391
        %v1424 = vmul.f32 %v1326, %v1395
        %v1425 = vmul.f32 %v1330, %v1395
        %v1426 = vmul.f32 %v1334, %v1395
        %v1427 = vmul.f32 %v1338, %v1395
        %v1428 = vmul.f32 %v1342, %v1395
        %v1429 = vmul.f32 %v1346, %v1395
        %v1430 = vmul.f32 %v1350, %v1395
        %v1431 = vmul.f32 %v1354, %v1395
        %v1432 = vadd.f32 %v1183, %v1400
        %v1433 = vadd.f32 %v1184, %v1401
        %v1434 = vadd.f32 %v1185, %v1402
        %v1435 = vadd.f32 %v1186, %v1403
        %v1436 = vadd.f32 %v1187, %v1404
        %v1437 = vadd.f32 %v1188, %v1405
        %v1438 = vadd.f32 %v1189, %v1406
        %v1439 = vadd.f32 %v1190, %v1407
        %v1440 = vadd.f32 %v1191, %v1408
        %v1441 = vadd.f32 %v1192, %v1409
        %v1442 = vadd.f32 %v1193, %v1410
        %v1443 = vadd.f32 %v1194, %v1411
        %v1444 = vadd.f32 %v1195, %v1412
        %v1445 = vadd.f32 %v1196, %v1413
        %v1446 = vadd.f32 %v1197, %v1414
        %v1447 = vadd.f32 %v1198, %v1415
        %v1448 = vadd.f32 %v1199, %v1416
        %v1449 = vadd.f32 %v1200, %v1417
        %v1450 = vadd.f32 %v1201, %v1418
        %v1451 = vadd.f32 %v1202, %v1419
        %v1452 = vadd.f32 %v1203, %v1420
        %v1453 = vadd.f32 %v1204, %v1421
        %v1454 = vadd.f32 %v1205, %v1422
        %v1455 = vadd.f32 %v1206, %v1423
        %v1456 = vadd.f32 %v1207, %v1424
        %v1457 = vadd.f32 %v1208, %v1425
        %v1458 = vadd.f32 %v1209, %v1426
        %v1459 = vadd.f32 %v1210, %v1427
        %v1460 = vadd.f32 %v1211, %v1428
        %v1461 = vadd.f32 %v1212, %v1429
        %v1462 = vadd.f32 %v1213, %v1430
        %v1463 = vadd.f32 %v1214, %v1431
        %v1464 = vlaneseq
        %v1465 = vshrl.u32 %v1464, 7
        %v1466 = vsub.s32 0, %v1465
        %v1467 = vrot.slane %v712, %v1466
        %1469 = vbcast.lane.b32.xlu0 %v1467, 256
        %v1470 = vpop.permute.xlu0 %1469
        %s1472 = sor.u32 256, 8
        %1473 = vbcast.lane.b32.xlu0 %v1467, %s1472
        %v1474 = vpop.permute.xlu0 %1473
        %s1476 = sor.u32 256, 16
        %1477 = vbcast.lane.b32.xlu0 %v1467, %s1476
        %v1478 = vpop.permute.xlu0 %1477
        %s1480 = sor.u32 256, 24
        %1481 = vbcast.lane.b32.xlu0 %v1467, %s1480
        %v1482 = vpop.permute.xlu0 %1481
        %s1484 = sor.u32 256, 32
        %1485 = vbcast.lane.b32.xlu0 %v1467, %s1484
        %v1486 = vpop.permute.xlu0 %1485
        %s1488 = sor.u32 256, 40
        %1489 = vbcast.lane.b32.xlu0 %v1467, %s1488
        %v1490 = vpop.permute.xlu0 %1489
        %s1492 = sor.u32 256, 48
        %1493 = vbcast.lane.b32.xlu0 %v1467, %s1492
        %v1494 = vpop.permute.xlu0 %1493
        %s1496 = sor.u32 256, 56
        %1497 = vbcast.lane.b32.xlu0 %v1467, %s1496
        %v1498 = vpop.permute.xlu0 %1497
        %v1499 = vlaneseq
        %v1500 = vshrl.u32 %v1499, 7
        %v1501 = vsub.s32 1, %v1500
        %v1502 = vrot.slane %v712, %v1501
        %1504 = vbcast.lane.b32.xlu0 %v1502, 256
        %v1505 = vpop.permute.xlu0 %1504
        %s1507 = sor.u32 256, 8
        %1508 = vbcast.lane.b32.xlu0 %v1502, %s1507
        %v1509 = vpop.permute.xlu0 %1508
        %s1511 = sor.u32 256, 16
        %1512 = vbcast.lane.b32.xlu0 %v1502, %s1511
        %v1513 = vpop.permute.xlu0 %1512
        %s1515 = sor.u32 256, 24
        %1516 = vbcast.lane.b32.xlu0 %v1502, %s1515
        %v1517 = vpop.permute.xlu0 %1516
        %s1519 = sor.u32 256, 32
        %1520 = vbcast.lane.b32.xlu0 %v1502, %s1519
        %v1521 = vpop.permute.xlu0 %1520
        %s1523 = sor.u32 256, 40
        %1524 = vbcast.lane.b32.xlu0 %v1502, %s1523
        %v1525 = vpop.permute.xlu0 %1524
        %s1527 = sor.u32 256, 48
        %1528 = vbcast.lane.b32.xlu0 %v1502, %s1527
        %v1529 = vpop.permute.xlu0 %1528
        %s1531 = sor.u32 256, 56
        %1532 = vbcast.lane.b32.xlu0 %v1502, %s1531
        %v1533 = vpop.permute.xlu0 %1532
        %v1534 = vlaneseq
        %v1535 = vshrl.u32 %v1534, 7
        %v1536 = vsub.s32 2, %v1535
        %v1537 = vrot.slane %v712, %v1536
        %1539 = vbcast.lane.b32.xlu0 %v1537, 256
        %v1540 = vpop.permute.xlu0 %1539
        %s1542 = sor.u32 256, 8
        %1543 = vbcast.lane.b32.xlu0 %v1537, %s1542
        %v1544 = vpop.permute.xlu0 %1543
        %s1546 = sor.u32 256, 16
        %1547 = vbcast.lane.b32.xlu0 %v1537, %s1546
        %v1548 = vpop.permute.xlu0 %1547
        %s1550 = sor.u32 256, 24
        %1551 = vbcast.lane.b32.xlu0 %v1537, %s1550
        %v1552 = vpop.permute.xlu0 %1551
        %s1554 = sor.u32 256, 32
        %1555 = vbcast.lane.b32.xlu0 %v1537, %s1554
        %v1556 = vpop.permute.xlu0 %1555
        %s1558 = sor.u32 256, 40
        %1559 = vbcast.lane.b32.xlu0 %v1537, %s1558
        %v1560 = vpop.permute.xlu0 %1559
        %s1562 = sor.u32 256, 48
        %1563 = vbcast.lane.b32.xlu0 %v1537, %s1562
        %v1564 = vpop.permute.xlu0 %1563
        %s1566 = sor.u32 256, 56
        %1567 = vbcast.lane.b32.xlu0 %v1537, %s1566
        %v1568 = vpop.permute.xlu0 %1567
        %v1569 = vlaneseq
        %v1570 = vshrl.u32 %v1569, 7
        %v1571 = vsub.s32 3, %v1570
        %v1572 = vrot.slane %v712, %v1571
        %1574 = vbcast.lane.b32.xlu0 %v1572, 256
        %v1575 = vpop.permute.xlu0 %1574
        %s1577 = sor.u32 256, 8
        %1578 = vbcast.lane.b32.xlu0 %v1572, %s1577
        %v1579 = vpop.permute.xlu0 %1578
        %s1581 = sor.u32 256, 16
        %1582 = vbcast.lane.b32.xlu0 %v1572, %s1581
        %v1583 = vpop.permute.xlu0 %1582
        %s1585 = sor.u32 256, 24
        %1586 = vbcast.lane.b32.xlu0 %v1572, %s1585
        %v1587 = vpop.permute.xlu0 %1586
        %s1589 = sor.u32 256, 32
        %1590 = vbcast.lane.b32.xlu0 %v1572, %s1589
        %v1591 = vpop.permute.xlu0 %1590
        %s1593 = sor.u32 256, 40
        %1594 = vbcast.lane.b32.xlu0 %v1572, %s1593
        %v1595 = vpop.permute.xlu0 %1594
        %s1597 = sor.u32 256, 48
        %1598 = vbcast.lane.b32.xlu0 %v1572, %s1597
        %v1599 = vpop.permute.xlu0 %1598
        %s1601 = sor.u32 256, 56
        %1602 = vbcast.lane.b32.xlu0 %v1572, %s1601
        %v1603 = vpop.permute.xlu0 %1602
        %v1606 = vunpack.c.l.s4 1966171168
        %v1607 = vunpack.c.0.s8 %v1606
        %v1608 = vlaneseq
        %v1609 = vshrl.u32 %v1608, 7
        %v1610 = vsub.s32 %v1607, %v1609
        %v1611 = vrot.slane %v714, %v1610
        %v1612 = vcombine.high %v1611, %v1611
        %v1614 = vunpack.c.l.s4 1966171168
        %v1615 = vunpack.c.0.s8 %v1614
        %v1616 = vlaneseq
        %v1617 = vshrl.u32 %v1616, 7
        %v1618 = vsub.s32 %v1615, %v1617
        %v1619 = vrot.slane %v1611, %v1618
        %v1621 = vunpack.c.l.s4 1966171168
        %v1622 = vunpack.c.0.s8 %v1621
        %v1623 = vlaneseq
        %v1624 = vshrl.u32 %v1623, 7
        %v1625 = vsub.s32 %v1622, %v1624
        %v1626 = vrot.slane %v1612, %v1625
        %v1627 = vcombine.high %v1619, %v1619
        %v1628 = vcombine.high %v1626, %v1626
        %v1629 = vlaneseq
        %v1630 = vshrl.u32 %v1629, 7
        %v1631 = vsub.s32 0, %v1630
        %v1632 = vrot.slane %v1619, %v1631
        %v1633 = vlaneseq
        %v1634 = vshrl.u32 %v1633, 7
        %v1635 = vsub.s32 0, %v1634
        %v1636 = vrot.slane %v1626, %v1635
        %v1637 = vlaneseq
        %v1638 = vshrl.u32 %v1637, 7
        %v1639 = vsub.s32 0, %v1638
        %v1640 = vrot.slane %v1627, %v1639
        %v1641 = vlaneseq
        %v1642 = vshrl.u32 %v1641, 7
        %v1643 = vsub.s32 0, %v1642
        %v1644 = vrot.slane %v1628, %v1643
        %v1649 = vmul.f32 %v1470, %v1632
        %v1650 = vmul.f32 %v1474, %v1632
        %v1651 = vmul.f32 %v1478, %v1632
        %v1652 = vmul.f32 %v1482, %v1632
        %v1653 = vmul.f32 %v1486, %v1632
        %v1654 = vmul.f32 %v1490, %v1632
        %v1655 = vmul.f32 %v1494, %v1632
        %v1656 = vmul.f32 %v1498, %v1632
        %v1657 = vmul.f32 %v1505, %v1636
        %v1658 = vmul.f32 %v1509, %v1636
        %v1659 = vmul.f32 %v1513, %v1636
        %v1660 = vmul.f32 %v1517, %v1636
        %v1661 = vmul.f32 %v1521, %v1636
        %v1662 = vmul.f32 %v1525, %v1636
        %v1663 = vmul.f32 %v1529, %v1636
        %v1664 = vmul.f32 %v1533, %v1636
        %v1665 = vmul.f32 %v1540, %v1640
        %v1666 = vmul.f32 %v1544, %v1640
        %v1667 = vmul.f32 %v1548, %v1640
        %v1668 = vmul.f32 %v1552, %v1640
        %v1669 = vmul.f32 %v1556, %v1640
        %v1670 = vmul.f32 %v1560, %v1640
        %v1671 = vmul.f32 %v1564, %v1640
        %v1672 = vmul.f32 %v1568, %v1640
        %v1673 = vmul.f32 %v1575, %v1644
        %v1674 = vmul.f32 %v1579, %v1644
        %v1675 = vmul.f32 %v1583, %v1644
        %v1676 = vmul.f32 %v1587, %v1644
        %v1677 = vmul.f32 %v1591, %v1644
        %v1678 = vmul.f32 %v1595, %v1644
        %v1679 = vmul.f32 %v1599, %v1644
        %v1680 = vmul.f32 %v1603, %v1644
        %v1681 = vadd.f32 %v1432, %v1649
        %v1682 = vadd.f32 %v1433, %v1650
        %v1683 = vadd.f32 %v1434, %v1651
        %v1684 = vadd.f32 %v1435, %v1652
        %v1685 = vadd.f32 %v1436, %v1653
        %v1686 = vadd.f32 %v1437, %v1654
        %v1687 = vadd.f32 %v1438, %v1655
        %v1688 = vadd.f32 %v1439, %v1656
        %v1689 = vadd.f32 %v1440, %v1657
        %v1690 = vadd.f32 %v1441, %v1658
        %v1691 = vadd.f32 %v1442, %v1659
        %v1692 = vadd.f32 %v1443, %v1660
        %v1693 = vadd.f32 %v1444, %v1661
        %v1694 = vadd.f32 %v1445, %v1662
        %v1695 = vadd.f32 %v1446, %v1663
        %v1696 = vadd.f32 %v1447, %v1664
        %v1697 = vadd.f32 %v1448, %v1665
        %v1698 = vadd.f32 %v1449, %v1666
        %v1699 = vadd.f32 %v1450, %v1667
        %v1700 = vadd.f32 %v1451, %v1668
        %v1701 = vadd.f32 %v1452, %v1669
        %v1702 = vadd.f32 %v1453, %v1670
        %v1703 = vadd.f32 %v1454, %v1671
        %v1704 = vadd.f32 %v1455, %v1672
        %v1705 = vadd.f32 %v1456, %v1673
        %v1706 = vadd.f32 %v1457, %v1674
        %v1707 = vadd.f32 %v1458, %v1675
        %v1708 = vadd.f32 %v1459, %v1676
        %v1709 = vadd.f32 %v1460, %v1677
        %v1710 = vadd.f32 %v1461, %v1678
        %v1711 = vadd.f32 %v1462, %v1679
        %v1712 = vadd.f32 %v1463, %v1680
        %vm1713 = vcmask 523264
        %v1714 = vsel %vm1713, %v1681, -inf
        %1715 = vmax.xlane.f32.xlu0 %v1714
        %v1716 = vpop.xlane.xlu0 %1715
        %v1717 = vsel %vm1713, %v1682, -inf
        %1718 = vmax.xlane.f32.xlu0 %v1717
        %v1719 = vpop.xlane.xlu0 %1718
        %v1720 = vsel %vm1713, %v1683, -inf
        %1721 = vmax.xlane.f32.xlu0 %v1720
        %v1722 = vpop.xlane.xlu0 %1721
        %v1723 = vsel %vm1713, %v1684, -inf
        %1724 = vmax.xlane.f32.xlu0 %v1723
        %v1725 = vpop.xlane.xlu0 %1724
        %v1726 = vsel %vm1713, %v1685, -inf
        %1727 = vmax.xlane.f32.xlu0 %v1726
        %v1728 = vpop.xlane.xlu0 %1727
        %v1729 = vsel %vm1713, %v1686, -inf
        %1730 = vmax.xlane.f32.xlu0 %v1729
        %v1731 = vpop.xlane.xlu0 %1730
        %v1732 = vsel %vm1713, %v1687, -inf
        %1733 = vmax.xlane.f32.xlu0 %v1732
        %v1734 = vpop.xlane.xlu0 %1733
        %v1735 = vsel %vm1713, %v1688, -inf
        %1736 = vmax.xlane.f32.xlu0 %v1735
        %v1737 = vpop.xlane.xlu0 %1736
        %v1738 = vsel %vm1713, %v1689, -inf
        %1739 = vmax.xlane.f32.xlu0 %v1738
        %v1740 = vpop.xlane.xlu0 %1739
        %v1741 = vsel %vm1713, %v1690, -inf
        %1742 = vmax.xlane.f32.xlu0 %v1741
        %v1743 = vpop.xlane.xlu0 %1742
        %v1744 = vsel %vm1713, %v1691, -inf
        %1745 = vmax.xlane.f32.xlu0 %v1744
        %v1746 = vpop.xlane.xlu0 %1745
        %v1747 = vsel %vm1713, %v1692, -inf
        %1748 = vmax.xlane.f32.xlu0 %v1747
        %v1749 = vpop.xlane.xlu0 %1748
        %v1750 = vsel %vm1713, %v1693, -inf
        %1751 = vmax.xlane.f32.xlu0 %v1750
        %v1752 = vpop.xlane.xlu0 %1751
        %v1753 = vsel %vm1713, %v1694, -inf
        %1754 = vmax.xlane.f32.xlu0 %v1753
        %v1755 = vpop.xlane.xlu0 %1754
        %v1756 = vsel %vm1713, %v1695, -inf
        %1757 = vmax.xlane.f32.xlu0 %v1756
        %v1758 = vpop.xlane.xlu0 %1757
        %v1759 = vsel %vm1713, %v1696, -inf
        %1760 = vmax.xlane.f32.xlu0 %v1759
        %v1761 = vpop.xlane.xlu0 %1760
        %v1762 = vsel %vm1713, %v1697, -inf
        %1763 = vmax.xlane.f32.xlu0 %v1762
        %v1764 = vpop.xlane.xlu0 %1763
        %v1765 = vsel %vm1713, %v1698, -inf
        %1766 = vmax.xlane.f32.xlu0 %v1765
        %v1767 = vpop.xlane.xlu0 %1766
        %v1768 = vsel %vm1713, %v1699, -inf
        %1769 = vmax.xlane.f32.xlu0 %v1768
        %v1770 = vpop.xlane.xlu0 %1769
        %v1771 = vsel %vm1713, %v1700, -inf
        %1772 = vmax.xlane.f32.xlu0 %v1771
        %v1773 = vpop.xlane.xlu0 %1772
        %v1774 = vsel %vm1713, %v1701, -inf
        %1775 = vmax.xlane.f32.xlu0 %v1774
        %v1776 = vpop.xlane.xlu0 %1775
        %v1777 = vsel %vm1713, %v1702, -inf
        %1778 = vmax.xlane.f32.xlu0 %v1777
        %v1779 = vpop.xlane.xlu0 %1778
        %v1780 = vsel %vm1713, %v1703, -inf
        %1781 = vmax.xlane.f32.xlu0 %v1780
        %v1782 = vpop.xlane.xlu0 %1781
        %v1783 = vsel %vm1713, %v1704, -inf
        %1784 = vmax.xlane.f32.xlu0 %v1783
        %v1785 = vpop.xlane.xlu0 %1784
        %v1786 = vsel %vm1713, %v1705, -inf
        %1787 = vmax.xlane.f32.xlu0 %v1786
        %v1788 = vpop.xlane.xlu0 %1787
        %v1789 = vsel %vm1713, %v1706, -inf
        %1790 = vmax.xlane.f32.xlu0 %v1789
        %v1791 = vpop.xlane.xlu0 %1790
        %v1792 = vsel %vm1713, %v1707, -inf
        %1793 = vmax.xlane.f32.xlu0 %v1792
        %v1794 = vpop.xlane.xlu0 %1793
        %v1795 = vsel %vm1713, %v1708, -inf
        %1796 = vmax.xlane.f32.xlu0 %v1795
        %v1797 = vpop.xlane.xlu0 %1796
        %v1798 = vsel %vm1713, %v1709, -inf
        %1799 = vmax.xlane.f32.xlu0 %v1798
        %v1800 = vpop.xlane.xlu0 %1799
        %v1801 = vsel %vm1713, %v1710, -inf
        %1802 = vmax.xlane.f32.xlu0 %v1801
        %v1803 = vpop.xlane.xlu0 %1802
        %v1804 = vsel %vm1713, %v1711, -inf
        %1805 = vmax.xlane.f32.xlu0 %v1804
        %v1806 = vpop.xlane.xlu0 %1805
        %v1807 = vsel %vm1713, %v1712, -inf
        %1808 = vmax.xlane.f32.xlu0 %v1807
        %v1809 = vpop.xlane.xlu0 %1808
        %v1810 = vsub.f32 %v1681, %v1716
        %v1811 = vsub.f32 %v1682, %v1719
        %v1812 = vsub.f32 %v1683, %v1722
        %v1813 = vsub.f32 %v1684, %v1725
        %v1814 = vsub.f32 %v1685, %v1728
        %v1815 = vsub.f32 %v1686, %v1731
        %v1816 = vsub.f32 %v1687, %v1734
        %v1817 = vsub.f32 %v1688, %v1737
        %v1818 = vsub.f32 %v1689, %v1740
        %v1819 = vsub.f32 %v1690, %v1743
        %v1820 = vsub.f32 %v1691, %v1746
        %v1821 = vsub.f32 %v1692, %v1749
        %v1822 = vsub.f32 %v1693, %v1752
        %v1823 = vsub.f32 %v1694, %v1755
        %v1824 = vsub.f32 %v1695, %v1758
        %v1825 = vsub.f32 %v1696, %v1761
        %v1826 = vsub.f32 %v1697, %v1764
        %v1827 = vsub.f32 %v1698, %v1767
        %v1828 = vsub.f32 %v1699, %v1770
        %v1829 = vsub.f32 %v1700, %v1773
        %v1830 = vsub.f32 %v1701, %v1776
        %v1831 = vsub.f32 %v1702, %v1779
        %v1832 = vsub.f32 %v1703, %v1782
        %v1833 = vsub.f32 %v1704, %v1785
        %v1834 = vsub.f32 %v1705, %v1788
        %v1835 = vsub.f32 %v1706, %v1791
        %v1836 = vsub.f32 %v1707, %v1794
        %v1837 = vsub.f32 %v1708, %v1797
        %v1838 = vsub.f32 %v1709, %v1800
        %v1839 = vsub.f32 %v1710, %v1803
        %v1840 = vsub.f32 %v1711, %v1806
        %v1841 = vsub.f32 %v1712, %v1809
        %v1842 = vmul.f32 %v1810, 1.442695
        %v1843 = vpow.pop %v1842
        %v1844 = vmul.f32 %v1811, 1.442695
        %v1845 = vpow.pop %v1844
        %v1846 = vmul.f32 %v1812, 1.442695
        %v1847 = vpow.pop %v1846
        %v1848 = vmul.f32 %v1813, 1.442695
        %v1849 = vpow.pop %v1848
        %v1850 = vmul.f32 %v1814, 1.442695
        %v1851 = vpow.pop %v1850
        %v1852 = vmul.f32 %v1815, 1.442695
        %v1853 = vpow.pop %v1852
        %v1854 = vmul.f32 %v1816, 1.442695
        %v1855 = vpow.pop %v1854
        %v1856 = vmul.f32 %v1817, 1.442695
        %v1857 = vpow.pop %v1856
        %v1858 = vmul.f32 %v1818, 1.442695
        %v1859 = vpow.pop %v1858
        %v1860 = vmul.f32 %v1819, 1.442695
        %v1861 = vpow.pop %v1860
        %v1862 = vmul.f32 %v1820, 1.442695
        %v1863 = vpow.pop %v1862
        %v1864 = vmul.f32 %v1821, 1.442695
        %v1865 = vpow.pop %v1864
        %v1866 = vmul.f32 %v1822, 1.442695
        %v1867 = vpow.pop %v1866
        %v1868 = vmul.f32 %v1823, 1.442695
        %v1869 = vpow.pop %v1868
        %v1870 = vmul.f32 %v1824, 1.442695
        %v1871 = vpow.pop %v1870
        %v1872 = vmul.f32 %v1825, 1.442695
        %v1873 = vpow.pop %v1872
        %v1874 = vmul.f32 %v1826, 1.442695
        %v1875 = vpow.pop %v1874
        %v1876 = vmul.f32 %v1827, 1.442695
        %v1877 = vpow.pop %v1876
        %v1878 = vmul.f32 %v1828, 1.442695
        %v1879 = vpow.pop %v1878
        %v1880 = vmul.f32 %v1829, 1.442695
        %v1881 = vpow.pop %v1880
        %v1882 = vmul.f32 %v1830, 1.442695
        %v1883 = vpow.pop %v1882
        %v1884 = vmul.f32 %v1831, 1.442695
        %v1885 = vpow.pop %v1884
        %v1886 = vmul.f32 %v1832, 1.442695
        %v1887 = vpow.pop %v1886
        %v1888 = vmul.f32 %v1833, 1.442695
        %v1889 = vpow.pop %v1888
        %v1890 = vmul.f32 %v1834, 1.442695
        %v1891 = vpow.pop %v1890
        %v1892 = vmul.f32 %v1835, 1.442695
        %v1893 = vpow.pop %v1892
        %v1894 = vmul.f32 %v1836, 1.442695
        %v1895 = vpow.pop %v1894
        %v1896 = vmul.f32 %v1837, 1.442695
        %v1897 = vpow.pop %v1896
        %v1898 = vmul.f32 %v1838, 1.442695
        %v1899 = vpow.pop %v1898
        %v1900 = vmul.f32 %v1839, 1.442695
        %v1901 = vpow.pop %v1900
        %v1902 = vmul.f32 %v1840, 1.442695
        %v1903 = vpow.pop %v1902
        %v1904 = vmul.f32 %v1841, 1.442695
        %v1905 = vpow.pop %v1904
        %v1906 = vsel %vm1713, %v1843, 0.0
        %1907 = vadd.xlane.f32.xlu0 %v1906
        %v1908 = vpop.xlane.xlu0 %1907
        %v1909 = vsel %vm1713, %v1845, 0.0
        %1910 = vadd.xlane.f32.xlu0 %v1909
        %v1911 = vpop.xlane.xlu0 %1910
        %v1912 = vsel %vm1713, %v1847, 0.0
        %1913 = vadd.xlane.f32.xlu0 %v1912
        %v1914 = vpop.xlane.xlu0 %1913
        %v1915 = vsel %vm1713, %v1849, 0.0
        %1916 = vadd.xlane.f32.xlu0 %v1915
        %v1917 = vpop.xlane.xlu0 %1916
        %v1918 = vsel %vm1713, %v1851, 0.0
        %1919 = vadd.xlane.f32.xlu0 %v1918
        %v1920 = vpop.xlane.xlu0 %1919
        %v1921 = vsel %vm1713, %v1853, 0.0
        %1922 = vadd.xlane.f32.xlu0 %v1921
        %v1923 = vpop.xlane.xlu0 %1922
        %v1924 = vsel %vm1713, %v1855, 0.0
        %1925 = vadd.xlane.f32.xlu0 %v1924
        %v1926 = vpop.xlane.xlu0 %1925
        %v1927 = vsel %vm1713, %v1857, 0.0
        %1928 = vadd.xlane.f32.xlu0 %v1927
        %v1929 = vpop.xlane.xlu0 %1928
        %v1930 = vsel %vm1713, %v1859, 0.0
        %1931 = vadd.xlane.f32.xlu0 %v1930
        %v1932 = vpop.xlane.xlu0 %1931
        %v1933 = vsel %vm1713, %v1861, 0.0
        %1934 = vadd.xlane.f32.xlu0 %v1933
        %v1935 = vpop.xlane.xlu0 %1934
        %v1936 = vsel %vm1713, %v1863, 0.0
        %1937 = vadd.xlane.f32.xlu0 %v1936
        %v1938 = vpop.xlane.xlu0 %1937
        %v1939 = vsel %vm1713, %v1865, 0.0
        %1940 = vadd.xlane.f32.xlu0 %v1939
        %v1941 = vpop.xlane.xlu0 %1940
        %v1942 = vsel %vm1713, %v1867, 0.0
        %1943 = vadd.xlane.f32.xlu0 %v1942
        %v1944 = vpop.xlane.xlu0 %1943
        %v1945 = vsel %vm1713, %v1869, 0.0
        %1946 = vadd.xlane.f32.xlu0 %v1945
        %v1947 = vpop.xlane.xlu0 %1946
        %v1948 = vsel %vm1713, %v1871, 0.0
        %1949 = vadd.xlane.f32.xlu0 %v1948
        %v1950 = vpop.xlane.xlu0 %1949
        %v1951 = vsel %vm1713, %v1873, 0.0
        %1952 = vadd.xlane.f32.xlu0 %v1951
        %v1953 = vpop.xlane.xlu0 %1952
        %v1954 = vsel %vm1713, %v1875, 0.0
        %1955 = vadd.xlane.f32.xlu0 %v1954
        %v1956 = vpop.xlane.xlu0 %1955
        %v1957 = vsel %vm1713, %v1877, 0.0
        %1958 = vadd.xlane.f32.xlu0 %v1957
        %v1959 = vpop.xlane.xlu0 %1958
        %v1960 = vsel %vm1713, %v1879, 0.0
        %1961 = vadd.xlane.f32.xlu0 %v1960
        %v1962 = vpop.xlane.xlu0 %1961
        %v1963 = vsel %vm1713, %v1881, 0.0
        %1964 = vadd.xlane.f32.xlu0 %v1963
        %v1965 = vpop.xlane.xlu0 %1964
        %v1966 = vsel %vm1713, %v1883, 0.0
        %1967 = vadd.xlane.f32.xlu0 %v1966
        %v1968 = vpop.xlane.xlu0 %1967
        %v1969 = vsel %vm1713, %v1885, 0.0
        %1970 = vadd.xlane.f32.xlu0 %v1969
        %v1971 = vpop.xlane.xlu0 %1970
        %v1972 = vsel %vm1713, %v1887, 0.0
        %1973 = vadd.xlane.f32.xlu0 %v1972
        %v1974 = vpop.xlane.xlu0 %1973
        %v1975 = vsel %vm1713, %v1889, 0.0
        %1976 = vadd.xlane.f32.xlu0 %v1975
        %v1977 = vpop.xlane.xlu0 %1976
        %v1978 = vsel %vm1713, %v1891, 0.0
        %1979 = vadd.xlane.f32.xlu0 %v1978
        %v1980 = vpop.xlane.xlu0 %1979
        %v1981 = vsel %vm1713, %v1893, 0.0
        %1982 = vadd.xlane.f32.xlu0 %v1981
        %v1983 = vpop.xlane.xlu0 %1982
        %v1984 = vsel %vm1713, %v1895, 0.0
        %1985 = vadd.xlane.f32.xlu0 %v1984
        %v1986 = vpop.xlane.xlu0 %1985
        %v1987 = vsel %vm1713, %v1897, 0.0
        %1988 = vadd.xlane.f32.xlu0 %v1987
        %v1989 = vpop.xlane.xlu0 %1988
        %v1990 = vsel %vm1713, %v1899, 0.0
        %1991 = vadd.xlane.f32.xlu0 %v1990
        %v1992 = vpop.xlane.xlu0 %1991
        %v1993 = vsel %vm1713, %v1901, 0.0
        %1994 = vadd.xlane.f32.xlu0 %v1993
        %v1995 = vpop.xlane.xlu0 %1994
        %v1996 = vsel %vm1713, %v1903, 0.0
        %1997 = vadd.xlane.f32.xlu0 %v1996
        %v1998 = vpop.xlane.xlu0 %1997
        %v1999 = vsel %vm1713, %v1905, 0.0
        %2000 = vadd.xlane.f32.xlu0 %v1999
        %v2001 = vpop.xlane.xlu0 %2000
        %v2002 = vrcp.pop %v1908
        %v2003 = vrcp.pop %v1911
        %v2004 = vrcp.pop %v1914
        %v2005 = vrcp.pop %v1917
        %v2006 = vrcp.pop %v1920
        %v2007 = vrcp.pop %v1923
        %v2008 = vrcp.pop %v1926
        %v2009 = vrcp.pop %v1929
        %v2010 = vrcp.pop %v1932
        %v2011 = vrcp.pop %v1935
        %v2012 = vrcp.pop %v1938
        %v2013 = vrcp.pop %v1941
        %v2014 = vrcp.pop %v1944
        %v2015 = vrcp.pop %v1947
        %v2016 = vrcp.pop %v1950
        %v2017 = vrcp.pop %v1953
        %v2018 = vrcp.pop %v1956
        %v2019 = vrcp.pop %v1959
        %v2020 = vrcp.pop %v1962
        %v2021 = vrcp.pop %v1965
        %v2022 = vrcp.pop %v1968
        %v2023 = vrcp.pop %v1971
        %v2024 = vrcp.pop %v1974
        %v2025 = vrcp.pop %v1977
        %v2026 = vrcp.pop %v1980
        %v2027 = vrcp.pop %v1983
        %v2028 = vrcp.pop %v1986
        %v2029 = vrcp.pop %v1989
        %v2030 = vrcp.pop %v1992
        %v2031 = vrcp.pop %v1995
        %v2032 = vrcp.pop %v1998
        %v2033 = vrcp.pop %v2001
        %v2034 = vmul.f32 %v1843, %v2002
        %v2035 = vmul.f32 %v1845, %v2003
        %v2036 = vmul.f32 %v1847, %v2004
        %v2037 = vmul.f32 %v1849, %v2005
        %v2038 = vmul.f32 %v1851, %v2006
        %v2039 = vmul.f32 %v1853, %v2007
        %v2040 = vmul.f32 %v1855, %v2008
        %v2041 = vmul.f32 %v1857, %v2009
        %v2042 = vmul.f32 %v1859, %v2010
        %v2043 = vmul.f32 %v1861, %v2011
        %v2044 = vmul.f32 %v1863, %v2012
        %v2045 = vmul.f32 %v1865, %v2013
        %v2046 = vmul.f32 %v1867, %v2014
        %v2047 = vmul.f32 %v1869, %v2015
        %v2048 = vmul.f32 %v1871, %v2016
        %v2049 = vmul.f32 %v1873, %v2017
        %v2050 = vmul.f32 %v1875, %v2018
        %v2051 = vmul.f32 %v1877, %v2019
        %v2052 = vmul.f32 %v1879, %v2020
        %v2053 = vmul.f32 %v1881, %v2021
        %v2054 = vmul.f32 %v1883, %v2022
        %v2055 = vmul.f32 %v1885, %v2023
        %v2056 = vmul.f32 %v1887, %v2024
        %v2057 = vmul.f32 %v1889, %v2025
        %v2058 = vmul.f32 %v1891, %v2026
        %v2059 = vmul.f32 %v1893, %v2027
        %v2060 = vmul.f32 %v1895, %v2028
        %v2061 = vmul.f32 %v1897, %v2029
        %v2062 = vmul.f32 %v1899, %v2030
        %v2063 = vmul.f32 %v1901, %v2031
        %v2064 = vmul.f32 %v1903, %v2032
        %v2065 = vmul.f32 %v1905, %v2033
        %v2066 = vcombine.low %v739, %v746
        %v2068 = vunpack.c.l.s4 1983009808
        %v2069 = vunpack.c.0.s8 %v2068
        %v2070 = vlaneseq
        %v2071 = vshrl.u32 %v2070, 7
        %v2072 = vsub.s32 %v2069, %v2071
        %v2073 = vrot.slane %v2066, %v2072
        %v2074 = vcombine.low %v747, %v748
        %v2076 = vunpack.c.l.s4 1983009808
        %v2077 = vunpack.c.0.s8 %v2076
        %v2078 = vlaneseq
        %v2079 = vshrl.u32 %v2078, 7
        %v2080 = vsub.s32 %v2077, %v2079
        %v2081 = vrot.slane %v2074, %v2080
        %v2082 = vcombine.low %v2073, %v2081
        %v2083 = vcombine.high %v2073, %v2081
        %v2085 = vunpack.c.l.s4 1934713408
        %v2086 = vunpack.c.0.s8 %v2085
        %v2087 = vlaneseq
        %v2088 = vshrl.u32 %v2087, 7
        %v2089 = vsub.s32 %v2086, %v2088
        %v2090 = vrot.slane %v2082, %v2089
        %v2092 = vunpack.c.l.s4 1934713408
        %v2093 = vunpack.c.0.s8 %v2092
        %v2094 = vlaneseq
        %v2095 = vshrl.u32 %v2094, 7
        %v2096 = vsub.s32 %v2093, %v2095
        %v2097 = vrot.slane %v2083, %v2096
        %v2098 = vcombine.high %v2090, 0.0
        %v2099 = vcombine.high %v2097, 0.0
        %v2101 = vsel %vm1713, %v2090, 0
        %v2104 = vsel %vm1713, %v2034, 0
        %v2107 = vsel %vm1713, %v2035, 0
        %v2110 = vsel %vm1713, %v2036, 0
        %v2113 = vsel %vm1713, %v2037, 0
        %v2116 = vsel %vm1713, %v2038, 0
        %v2119 = vsel %vm1713, %v2039, 0
        %v2122 = vsel %vm1713, %v2040, 0
        %v2125 = vsel %vm1713, %v2041, 0
        %2127 = vmatprep.subr.mxu0 0.0
        %2128 = vmatpush1.xpose.msra.mxu0 %v2104
        %2129 = vmatprep.subr.mxu0 0.0
        %2130 = vmatpush1.xpose.msra.mxu0 %v2107
        %2131 = vmatprep.subr.mxu0 0.0
        %2132 = vmatpush1.xpose.msra.mxu0 %v2110
        %2133 = vmatprep.subr.mxu0 0.0
        %2134 = vmatpush1.xpose.msra.mxu0 %v2113
        %2135 = vmatprep.subr.mxu0 0.0
        %2136 = vmatpush1.xpose.msra.mxu0 %v2116
        %2137 = vmatprep.subr.mxu0 0.0
        %2138 = vmatpush1.xpose.msra.mxu0 %v2119
        %2139 = vmatprep.subr.mxu0 0.0
        %2140 = vmatpush1.xpose.msra.mxu0 %v2122
        %2141 = vmatprep.subr.mxu0 0.0
        %2142 = vmatpush1.xpose.msra.mxu0 %v2125
        %2143 = vmatprep.subr.mxu0 0.0
        %2144 = vmatpush1.xpose.msra.mxu0 0.0
        %2145 = vmatprep.subr.mxu0 0.0
        %2146 = vmatpush1.xpose.msra.mxu0 0.0
        %2147 = vmatprep.subr.mxu0 0.0
        %2148 = vmatpush1.xpose.msra.mxu0 0.0
        %2149 = vmatprep.subr.mxu0 0.0
        %2150 = vmatpush1.xpose.msra.mxu0 0.0
        %2151 = vmatprep.subr.mxu0 0.0
        %2152 = vmatpush1.xpose.msra.mxu0 0.0
        %2153 = vmatprep.subr.mxu0 0.0
        %2154 = vmatpush1.xpose.msra.mxu0 0.0
        %2155 = vmatprep.subr.mxu0 0.0
        %2156 = vmatpush1.xpose.msra.mxu0 0.0
        %2157 = vmatprep.subr.mxu0 0.0
        %2158 = vmatpush1.xpose.msra.mxu0 0.0
        %2159 = vmatprep.subr.mxu0 0.0
        %2160 = vmatpush1.xpose.msra.mxu0 0.0
        %2161 = vmatprep.subr.mxu0 0.0
        %2162 = vmatpush1.xpose.msra.mxu0 0.0
        %2163 = vmatprep.subr.mxu0 0.0
        %2164 = vmatpush1.xpose.msra.mxu0 0.0
        %2165 = vmatprep.subr.mxu0 0.0
        %2166 = vmatpush1.xpose.msra.mxu0 0.0
        %2167 = vmatprep.subr.mxu0 0.0
        %2168 = vmatpush1.xpose.msra.mxu0 0.0
        %2169 = vmatprep.subr.mxu0 0.0
        %2170 = vmatpush1.xpose.msra.mxu0 0.0
        %2171 = vmatprep.subr.mxu0 0.0
        %2172 = vmatpush1.xpose.msra.mxu0 0.0
        %2173 = vmatprep.subr.mxu0 0.0
        %2174 = vmatpush1.xpose.msra.mxu0 0.0
        %2175 = vmatprep.subr.mxu0 0.0
        %2176 = vmatpush1.xpose.msra.mxu0 0.0
        %2177 = vmatprep.subr.mxu0 0.0
        %2178 = vmatpush1.xpose.msra.mxu0 0.0
        %2179 = vmatprep.subr.mxu0 0.0
        %2180 = vmatpush1.xpose.msra.mxu0 0.0
        %2181 = vmatprep.subr.mxu0 0.0
        %2182 = vmatpush1.xpose.msra.mxu0 0.0
        %2183 = vmatprep.subr.mxu0 0.0
        %2184 = vmatpush1.xpose.msra.mxu0 0.0
        %2185 = vmatprep.subr.mxu0 0.0
        %2186 = vmatpush1.xpose.msra.mxu0 0.0
        %2187 = vmatprep.subr.mxu0 0.0
        %2188 = vmatpush1.xpose.msra.mxu0 0.0
        %2189 = vmatprep.subr.mxu0 0.0
        %2190 = vmatpush1.xpose.msra.mxu0 0.0
        %2191 = vmatprep.mubr.f32.mxu0 0.0
        %2192 = vmatmul.mubr.f32.gmra.mrb[0].mxu0 %v2101
        %v2193 = vpop.f32.mrb[0].mxu0
        %v2194 = vadd.f32 0.0, %v2193
        %v2195 = vpop.f32.mrb[0].mxu0
        %2196 = vdwg.mxu0
        %v2198 = vsel %vm1713, %v2098, 0
        %v2201 = vsel %vm1713, %v2042, 0
        %v2204 = vsel %vm1713, %v2043, 0
        %v2207 = vsel %vm1713, %v2044, 0
        %v2210 = vsel %vm1713, %v2045, 0
        %v2213 = vsel %vm1713, %v2046, 0
        %v2216 = vsel %vm1713, %v2047, 0
        %v2219 = vsel %vm1713, %v2048, 0
        %v2222 = vsel %vm1713, %v2049, 0
        %2224 = vmatprep.subr.mxu0 0.0
        %2225 = vmatpush1.xpose.msra.mxu0 %v2201
        %2226 = vmatprep.subr.mxu0 0.0
        %2227 = vmatpush1.xpose.msra.mxu0 %v2204
        %2228 = vmatprep.subr.mxu0 0.0
        %2229 = vmatpush1.xpose.msra.mxu0 %v2207
        %2230 = vmatprep.subr.mxu0 0.0
        %2231 = vmatpush1.xpose.msra.mxu0 %v2210
        %2232 = vmatprep.subr.mxu0 0.0
        %2233 = vmatpush1.xpose.msra.mxu0 %v2213
        %2234 = vmatprep.subr.mxu0 0.0
        %2235 = vmatpush1.xpose.msra.mxu0 %v2216
        %2236 = vmatprep.subr.mxu0 0.0
        %2237 = vmatpush1.xpose.msra.mxu0 %v2219
        %2238 = vmatprep.subr.mxu0 0.0
        %2239 = vmatpush1.xpose.msra.mxu0 %v2222
        %2240 = vmatprep.subr.mxu0 0.0
        %2241 = vmatpush1.xpose.msra.mxu0 0.0
        %2242 = vmatprep.subr.mxu0 0.0
        %2243 = vmatpush1.xpose.msra.mxu0 0.0
        %2244 = vmatprep.subr.mxu0 0.0
        %2245 = vmatpush1.xpose.msra.mxu0 0.0
        %2246 = vmatprep.subr.mxu0 0.0
        %2247 = vmatpush1.xpose.msra.mxu0 0.0
        %2248 = vmatprep.subr.mxu0 0.0
        %2249 = vmatpush1.xpose.msra.mxu0 0.0
        %2250 = vmatprep.subr.mxu0 0.0
        %2251 = vmatpush1.xpose.msra.mxu0 0.0
        %2252 = vmatprep.subr.mxu0 0.0
        %2253 = vmatpush1.xpose.msra.mxu0 0.0
        %2254 = vmatprep.subr.mxu0 0.0
        %2255 = vmatpush1.xpose.msra.mxu0 0.0
        %2256 = vmatprep.subr.mxu0 0.0
        %2257 = vmatpush1.xpose.msra.mxu0 0.0
        %2258 = vmatprep.subr.mxu0 0.0
        %2259 = vmatpush1.xpose.msra.mxu0 0.0
        %2260 = vmatprep.subr.mxu0 0.0
        %2261 = vmatpush1.xpose.msra.mxu0 0.0
        %2262 = vmatprep.subr.mxu0 0.0
        %2263 = vmatpush1.xpose.msra.mxu0 0.0
        %2264 = vmatprep.subr.mxu0 0.0
        %2265 = vmatpush1.xpose.msra.mxu0 0.0
        %2266 = vmatprep.subr.mxu0 0.0
        %2267 = vmatpush1.xpose.msra.mxu0 0.0
        %2268 = vmatprep.subr.mxu0 0.0
        %2269 = vmatpush1.xpose.msra.mxu0 0.0
        %2270 = vmatprep.subr.mxu0 0.0
        %2271 = vmatpush1.xpose.msra.mxu0 0.0
        %2272 = vmatprep.subr.mxu0 0.0
        %2273 = vmatpush1.xpose.msra.mxu0 0.0
        %2274 = vmatprep.subr.mxu0 0.0
        %2275 = vmatpush1.xpose.msra.mxu0 0.0
        %2276 = vmatprep.subr.mxu0 0.0
        %2277 = vmatpush1.xpose.msra.mxu0 0.0
        %2278 = vmatprep.subr.mxu0 0.0
        %2279 = vmatpush1.xpose.msra.mxu0 0.0
        %2280 = vmatprep.subr.mxu0 0.0
        %2281 = vmatpush1.xpose.msra.mxu0 0.0
        %2282 = vmatprep.subr.mxu0 0.0
        %2283 = vmatpush1.xpose.msra.mxu0 0.0
        %2284 = vmatprep.subr.mxu0 0.0
        %2285 = vmatpush1.xpose.msra.mxu0 0.0
        %2286 = vmatprep.subr.mxu0 0.0
        %2287 = vmatpush1.xpose.msra.mxu0 0.0
        %2288 = vmatprep.mubr.f32.mxu0 0.0
        %2289 = vmatmul.mubr.f32.gmra.mrb[0].mxu0 %v2198
        %v2290 = vpop.f32.mrb[0].mxu0
        %v2291 = vadd.f32 0.0, %v2290
        %v2292 = vpop.f32.mrb[0].mxu0
        %2293 = vdwg.mxu0
        %v2295 = vsel %vm1713, %v2097, 0
        %v2298 = vsel %vm1713, %v2050, 0
        %v2301 = vsel %vm1713, %v2051, 0
        %v2304 = vsel %vm1713, %v2052, 0
        %v2307 = vsel %vm1713, %v2053, 0
        %v2310 = vsel %vm1713, %v2054, 0
        %v2313 = vsel %vm1713, %v2055, 0
        %v2316 = vsel %vm1713, %v2056, 0
        %v2319 = vsel %vm1713, %v2057, 0
        %2321 = vmatprep.subr.mxu0 0.0
        %2322 = vmatpush1.xpose.msra.mxu0 %v2298
        %2323 = vmatprep.subr.mxu0 0.0
        %2324 = vmatpush1.xpose.msra.mxu0 %v2301
        %2325 = vmatprep.subr.mxu0 0.0
        %2326 = vmatpush1.xpose.msra.mxu0 %v2304
        %2327 = vmatprep.subr.mxu0 0.0
        %2328 = vmatpush1.xpose.msra.mxu0 %v2307
        %2329 = vmatprep.subr.mxu0 0.0
        %2330 = vmatpush1.xpose.msra.mxu0 %v2310
        %2331 = vmatprep.subr.mxu0 0.0
        %2332 = vmatpush1.xpose.msra.mxu0 %v2313
        %2333 = vmatprep.subr.mxu0 0.0
        %2334 = vmatpush1.xpose.msra.mxu0 %v2316
        %2335 = vmatprep.subr.mxu0 0.0
        %2336 = vmatpush1.xpose.msra.mxu0 %v2319
        %2337 = vmatprep.subr.mxu0 0.0
        %2338 = vmatpush1.xpose.msra.mxu0 0.0
        %2339 = vmatprep.subr.mxu0 0.0
        %2340 = vmatpush1.xpose.msra.mxu0 0.0
        %2341 = vmatprep.subr.mxu0 0.0
        %2342 = vmatpush1.xpose.msra.mxu0 0.0
        %2343 = vmatprep.subr.mxu0 0.0
        %2344 = vmatpush1.xpose.msra.mxu0 0.0
        %2345 = vmatprep.subr.mxu0 0.0
        %2346 = vmatpush1.xpose.msra.mxu0 0.0
        %2347 = vmatprep.subr.mxu0 0.0
        %2348 = vmatpush1.xpose.msra.mxu0 0.0
        %2349 = vmatprep.subr.mxu0 0.0
        %2350 = vmatpush1.xpose.msra.mxu0 0.0
        %2351 = vmatprep.subr.mxu0 0.0
        %2352 = vmatpush1.xpose.msra.mxu0 0.0
        %2353 = vmatprep.subr.mxu0 0.0
        %2354 = vmatpush1.xpose.msra.mxu0 0.0
        %2355 = vmatprep.subr.mxu0 0.0
        %2356 = vmatpush1.xpose.msra.mxu0 0.0
        %2357 = vmatprep.subr.mxu0 0.0
        %2358 = vmatpush1.xpose.msra.mxu0 0.0
        %2359 = vmatprep.subr.mxu0 0.0
        %2360 = vmatpush1.xpose.msra.mxu0 0.0
        %2361 = vmatprep.subr.mxu0 0.0
        %2362 = vmatpush1.xpose.msra.mxu0 0.0
        %2363 = vmatprep.subr.mxu0 0.0
        %2364 = vmatpush1.xpose.msra.mxu0 0.0
        %2365 = vmatprep.subr.mxu0 0.0
        %2366 = vmatpush1.xpose.msra.mxu0 0.0
        %2367 = vmatprep.subr.mxu0 0.0
        %2368 = vmatpush1.xpose.msra.mxu0 0.0
        %2369 = vmatprep.subr.mxu0 0.0
        %2370 = vmatpush1.xpose.msra.mxu0 0.0
        %2371 = vmatprep.subr.mxu0 0.0
        %2372 = vmatpush1.xpose.msra.mxu0 0.0
        %2373 = vmatprep.subr.mxu0 0.0
        %2374 = vmatpush1.xpose.msra.mxu0 0.0
        %2375 = vmatprep.subr.mxu0 0.0
        %2376 = vmatpush1.xpose.msra.mxu0 0.0
        %2377 = vmatprep.subr.mxu0 0.0
        %2378 = vmatpush1.xpose.msra.mxu0 0.0
        %2379 = vmatprep.subr.mxu0 0.0
        %2380 = vmatpush1.xpose.msra.mxu0 0.0
        %2381 = vmatprep.subr.mxu0 0.0
        %2382 = vmatpush1.xpose.msra.mxu0 0.0
        %2383 = vmatprep.subr.mxu0 0.0
        %2384 = vmatpush1.xpose.msra.mxu0 0.0
        %2385 = vmatprep.mubr.f32.mxu0 0.0
        %2386 = vmatmul.mubr.f32.gmra.mrb[0].mxu0 %v2295
        %v2387 = vpop.f32.mrb[0].mxu0
        %v2388 = vadd.f32 0.0, %v2387
        %v2389 = vpop.f32.mrb[0].mxu0
        %2390 = vdwg.mxu0
        %v2392 = vsel %vm1713, %v2099, 0
        %v2395 = vsel %vm1713, %v2058, 0
        %v2398 = vsel %vm1713, %v2059, 0
        %v2401 = vsel %vm1713, %v2060, 0
        %v2404 = vsel %vm1713, %v2061, 0
        %v2407 = vsel %vm1713, %v2062, 0
        %v2410 = vsel %vm1713, %v2063, 0
        %v2413 = vsel %vm1713, %v2064, 0
        %v2416 = vsel %vm1713, %v2065, 0
        %2418 = vmatprep.subr.mxu0 0.0
        %2419 = vmatpush1.xpose.msra.mxu0 %v2395
        %2420 = vmatprep.subr.mxu0 0.0
        %2421 = vmatpush1.xpose.msra.mxu0 %v2398
        %2422 = vmatprep.subr.mxu0 0.0
        %2423 = vmatpush1.xpose.msra.mxu0 %v2401
        %2424 = vmatprep.subr.mxu0 0.0
        %2425 = vmatpush1.xpose.msra.mxu0 %v2404
        %2426 = vmatprep.subr.mxu0 0.0
        %2427 = vmatpush1.xpose.msra.mxu0 %v2407
        %2428 = vmatprep.subr.mxu0 0.0
        %2429 = vmatpush1.xpose.msra.mxu0 %v2410
        %2430 = vmatprep.subr.mxu0 0.0
        %2431 = vmatpush1.xpose.msra.mxu0 %v2413
        %2432 = vmatprep.subr.mxu0 0.0
        %2433 = vmatpush1.xpose.msra.mxu0 %v2416
        %2434 = vmatprep.subr.mxu0 0.0
        %2435 = vmatpush1.xpose.msra.mxu0 0.0
        %2436 = vmatprep.subr.mxu0 0.0
        %2437 = vmatpush1.xpose.msra.mxu0 0.0
        %2438 = vmatprep.subr.mxu0 0.0
        %2439 = vmatpush1.xpose.msra.mxu0 0.0
        %2440 = vmatprep.subr.mxu0 0.0
        %2441 = vmatpush1.xpose.msra.mxu0 0.0
        %2442 = vmatprep.subr.mxu0 0.0
        %2443 = vmatpush1.xpose.msra.mxu0 0.0
        %2444 = vmatprep.subr.mxu0 0.0
        %2445 = vmatpush1.xpose.msra.mxu0 0.0
        %2446 = vmatprep.subr.mxu0 0.0
        %2447 = vmatpush1.xpose.msra.mxu0 0.0
        %2448 = vmatprep.subr.mxu0 0.0
        %2449 = vmatpush1.xpose.msra.mxu0 0.0
        %2450 = vmatprep.subr.mxu0 0.0
        %2451 = vmatpush1.xpose.msra.mxu0 0.0
        %2452 = vmatprep.subr.mxu0 0.0
        %2453 = vmatpush1.xpose.msra.mxu0 0.0
        %2454 = vmatprep.subr.mxu0 0.0
        %2455 = vmatpush1.xpose.msra.mxu0 0.0
        %2456 = vmatprep.subr.mxu0 0.0
        %2457 = vmatpush1.xpose.msra.mxu0 0.0
        %2458 = vmatprep.subr.mxu0 0.0
        %2459 = vmatpush1.xpose.msra.mxu0 0.0
        %2460 = vmatprep.subr.mxu0 0.0
        %2461 = vmatpush1.xpose.msra.mxu0 0.0
        %2462 = vmatprep.subr.mxu0 0.0
        %2463 = vmatpush1.xpose.msra.mxu0 0.0
        %2464 = vmatprep.subr.mxu0 0.0
        %2465 = vmatpush1.xpose.msra.mxu0 0.0
        %2466 = vmatprep.subr.mxu0 0.0
        %2467 = vmatpush1.xpose.msra.mxu0 0.0
        %2468 = vmatprep.subr.mxu0 0.0
        %2469 = vmatpush1.xpose.msra.mxu0 0.0
        %2470 = vmatprep.subr.mxu0 0.0
        %2471 = vmatpush1.xpose.msra.mxu0 0.0
        %2472 = vmatprep.subr.mxu0 0.0
        %2473 = vmatpush1.xpose.msra.mxu0 0.0
        %2474 = vmatprep.subr.mxu0 0.0
        %2475 = vmatpush1.xpose.msra.mxu0 0.0
        %2476 = vmatprep.subr.mxu0 0.0
        %2477 = vmatpush1.xpose.msra.mxu0 0.0
        %2478 = vmatprep.subr.mxu0 0.0
        %2479 = vmatpush1.xpose.msra.mxu0 0.0
        %2480 = vmatprep.subr.mxu0 0.0
        %2481 = vmatpush1.xpose.msra.mxu0 0.0
        %2482 = vmatprep.mubr.f32.mxu0 0.0
        %2483 = vmatmul.mubr.f32.gmra.mrb[0].mxu0 %v2392
        %v2484 = vpop.f32.mrb[0].mxu0
        %v2485 = vadd.f32 0.0, %v2484
        %v2486 = vpop.f32.mrb[0].mxu0
        %2487 = vdwg.mxu0
        %v2488 = vcombine.low %v2194, %v2388
        %v2490 = vunpack.c.l.s4 1983009808
        %v2491 = vunpack.c.0.s8 %v2490
        %v2492 = vlaneseq
        %v2493 = vshrl.u32 %v2492, 7
        %v2494 = vsub.s32 %v2491, %v2493
        %v2495 = vrot.slane %v2488, %v2494
        %v2496 = vcombine.low %v2291, %v2485
        %v2498 = vunpack.c.l.s4 1983009808
        %v2499 = vunpack.c.0.s8 %v2498
        %v2500 = vlaneseq
        %v2501 = vshrl.u32 %v2500, 7
        %v2502 = vsub.s32 %v2499, %v2501
        %v2503 = vrot.slane %v2496, %v2502
        %v2504 = vcombine.low %v2495, %v2503
        %v2505 = vcombine.high %v2495, %v2503
        %v2507 = vunpack.c.l.s4 1934713408
        %v2508 = vunpack.c.0.s8 %v2507
        %v2509 = vlaneseq
        %v2510 = vshrl.u32 %v2509, 7
        %v2511 = vsub.s32 %v2508, %v2510
        %v2512 = vrot.slane %v2504, %v2511
        %v2514 = vunpack.c.l.s4 1934713408
        %v2515 = vunpack.c.0.s8 %v2514
        %v2516 = vlaneseq
        %v2517 = vshrl.u32 %v2516, 7
        %v2518 = vsub.s32 %v2515, %v2517
        %v2519 = vrot.slane %v2505, %v2518
        %v2520 = vcombine.high %v2512, 0.0
        %v2521 = vcombine.high %v2519, 0.0
        %2523 = vrot.lane.b32.xlu0 %v2520, 64
        %v2524 = vpop.permute.xlu0 %2523
        %2527 = vrot.lane.b32.xlu0 %v2521, 64
        %v2528 = vpop.permute.xlu0 %2527
        %v2530 = vsel %vm1713, %v2512, %v2524
        %v2531 = vsel %vm1713, %v2519, %v2528
        %v2532 = vld [vmem:[#allocation2] sm:$0xff]
        %v2534 = vcombine.high %v2532, %v2532
        %v2536 = vadd.f32 %v2530, %v2532
        %v2537 = vadd.f32 %v2531, %v2534
        %v2538 = vld [vmem:[%s6] sm:$0x3]
        %v2540 = vlaneseq
        %v2541 = vshrl.u32 %v2540, 7
        %v2542 = vsub.s32 0, %v2541
        %v2543 = vrot.slane %v2538, %v2542
        %v2544 = vlaneseq
        %v2545 = vshrl.u32 %v2544, 7
        %v2546 = vsub.s32 1, %v2545
        %v2547 = vrot.slane %v2538, %v2546
        %v2550 = vadd.f32 %v2536, %v2543
        %v2551 = vadd.f32 %v2537, %v2547
        %v2552 = vld [vmem:[%s356] sm:$0xff]
        %v2553 = vxor.u32 %v2550, 2147483648
        %v2554 = vxor.u32 %v2551, 2147483648
        %v2555 = vmul.f32 %v2553, 1.442695
        %v2556 = vpow.pop %v2555
        %v2557 = vmul.f32 %v2554, 1.442695
        %v2558 = vpow.pop %v2557
        %v2559 = vadd.f32 %v2556, 1.0
        %v2560 = vadd.f32 %v2558, 1.0
        %v2561 = vrcp.pop %v2559
        %v2562 = vmul.f32 1.0, %v2561
        %v2563 = vrcp.pop %v2560
        %v2564 = vmul.f32 1.0, %v2563
        %v2567 = vcombine.low %v2562, %v2564
        %v2569 = vmul.f32 %v2552, %v2567
        %v2570 = vadd.f32 %v2552, %v2569
        %2571 = vst [vmem:[%s368] sm:$0xff] %v2570
      $region56: #{th_forward.1} parent=47 // pred_fallthru
        _
      %p2572 = scmp.lt.s32.totalorder %s22, 1
      %s2573 = scalar_select %p2572, %s22, 1
      %s2574 = smul.addr %s2573, 2
      %s2575 = smul.addr %s2574, 4
      %s2576 = scalar_lea.vmem %s7, %s2575
      // Predicated region
      $region57: #{th_forward.1} parent=47 // pred_check
        %p2577 = pneg %p217
      $region58: #{th_forward.1} parent=47 // pred_check_branch
        %2579 = sbr.rel (%p2577) target = $region60
      $region59: #{th_forward.1} parent=47 // pred_region
        _
      $region60: #{th_forward.1} parent=47 // pred_fallthru
        _
    $region48: #{th_forward.1} parent=5 // pred_fallthru
      _
    %p2580 = scmp.le.s32.totalorder 2, %s13
    // Predicated region
    $region61: #{th_forward.1} parent=5 // pred_check
      %p2581 = pneg %p2580
    $region62: #{th_forward.1} parent=5 // pred_check_branch
      %2583 = sbr.rel (%p2581) target = $region64
    $region63: #{th_forward.1} parent=5 // pred_region
      %s2584 = ssub.s32 %s13, 2
      // Predicated region
      $region65: #{th_forward.1} parent=63 // pred_check
        %p2585 = pneg %p223
      $region66: #{th_forward.1} parent=63 // pred_check_branch
        %2587 = sbr.rel (%p2585) target = $region68
      $region67: #{th_forward.1} parent=63 // pred_region
        %p2588 = scmp.lt.s32.totalorder %s24, 1
        %s2589 = scalar_select %p2588, %s24, 1
        %s2590 = smul.addr %s2589, 2
        %s2591 = smul.addr %s2590, 4
        %s2592 = scalar_lea.vmem %s7, %s2591
      $region68: #{th_forward.1} parent=63 // pred_fallthru
        _
    $region64: #{th_forward.1} parent=5 // pred_fallthru
      _
  $region6: #{th_forward.1} parent=0 // loop_footer
    %s17 = sadd.s32 1, %s13
  $region7: #{th_forward.1} parent=0 // loop_footer_branch
    %12 = sbr.rel target = $region3
  $region8: #{th_forward.1} parent=0 // loop_exit
    _

</llo_original>
